<compile_context>
chip_gen: v6e
topology: v6e:2x2x1
jax: 0.10.0
libtpu: 0.0.40
codegen_flags: <defaults>
</compile_context>

<pallas_src>
import math

import jax
import jax.numpy as jnp
from jax import lax
from jax.experimental import pallas as pl
from jax.experimental.pallas import tpu as pltpu


# --------------------------------------------------------------------------
# Fused decoder kernel.
#   emb_ref   : (T*Bp, E)     bf16   time-major flattened embedded tokens
#   h0_ref    : (Bp, DHp)     f32    initial hidden (padded batch / hidden)
#   wih_t_ref : (E, 3*DHp)    bf16   W_ih^T, each gate block padded to DHp lanes
#   whh_t_ref : (DHp, 3*DHp)  bf16   W_hh^T, gate-padded
#   bih/bhh   : (1, 3*DHp)    f32    gate-padded biases
#   enc_ref   : (Bp, Se, DHp) bf16   encoder outputs (padded)
#   wc/wd_ref : (DHp, DHp)    bf16   split attention_fc weight (c-half / dec-half)
#   batt_ref  : (1, DHp)      f32
#   wfc_t_ref : (DHp, Vp)     bf16   fc weight, vocab padded to 128-lane multiple
#   bfc_ref   : (1, Vp)       f32
# outputs:
#   logits_ref: (T, Bp, Vp)   f32    time-major (lane-dense stores)
#   hidden_ref: (Bp, DHp)     f32
# scratch:
#   dec_scratch: (T, Bp, DHp) f32    time-major dec_output buffer
# All padding is with zeros and is mathematically exact (padded hidden lanes stay 0).
# --------------------------------------------------------------------------
def decoder_kernel(emb_ref, h0_ref, wih_t_ref, whh_t_ref, bih_ref, bhh_ref,
                   enc_ref, wc_ref, wd_ref, batt_ref, wfc_t_ref, bfc_ref,
                   logits_ref, hidden_ref, dec_scratch):
    f32 = jnp.float32
    bf16 = jnp.bfloat16
    T = logits_ref.shape[0]
    Bp = h0_ref.shape[0]
    DHp = h0_ref.shape[1]
    Vp = logits_ref.shape[2]

    # --- (1) hoisted input projection: ONE flattened (T*Bp, E) x (E, 3*DHp) matmul.
    gi_all = (jnp.dot(emb_ref[...], wih_t_ref[...], preferred_element_type=f32)
              + bih_ref[...]).reshape(T, Bp, 3 * DHp)                 # f32

    whh_t = whh_t_ref[...]                                            # (DHp, 3*DHp) bf16
    bhh = bhh_ref[...]                                                # (1, 3*DHp)   f32

    # --- (2) GRU recurrence: only h @ W_hh^T + gates on the serial critical path.
    # Only `h` stays live across iterations; each h_t goes straight to the
    # time-major scratch (full (Bp=8, DHp) unmasked tile store).
    # TODO(synk): for long sequences switch to lax.fori_loop over the scratch.
    h = h0_ref[...]                                                   # (Bp, DHp) f32
    for t in range(T):                                                # small static T -> unroll
        gi = gi_all[t]                                                # (Bp, 3*DHp)
        gh = jnp.dot(h.astype(bf16), whh_t, preferred_element_type=f32) + bhh
        rz = jax.nn.sigmoid(gi[:, :2 * DHp] + gh[:, :2 * DHp])        # fused r/z sigmoid
        r = rz[:, :DHp]                                               # vreg-aligned slices
        z = rz[:, DHp:]
        n = jnp.tanh(gi[:, 2 * DHp:] + r * gh[:, 2 * DHp:])
        h = (1.0 - z) * n + z * h
        dec_scratch[t] = h
    hidden_ref[...] = h

    # --- (3) attention: scores (Bp, T, Se), softmax lane-dense over encoder axis.
    dec_tm = dec_scratch[...]                                         # (T, Bp, DHp) f32
    dec_bm16 = jnp.transpose(dec_tm, (1, 0, 2)).astype(bf16)          # (Bp, T, DHp)
    enc16 = enc_ref[...]                                              # (Bp, Se, DHp) bf16

    att = jnp.einsum('btd,bed->bte', dec_bm16, enc16,
                     preferred_element_type=f32)                      # (Bp, T, Se)
    att = att - jnp.max(att, axis=-1, keepdims=True)
    p = jnp.exp(att)
    # approx reciprocal runs on the EUP slot; rows sum to 1 within ~1e-3 relative.
    att = p * pl.reciprocal(jnp.sum(p, axis=-1, keepdims=True), approx=True)

    c_bm = jnp.einsum('bte,bed->btd', att.astype(bf16), enc16,
                      preferred_element_type=f32)                     # (Bp, T, DHp) f32
    c16 = jnp.transpose(c_bm, (1, 0, 2)).reshape(T * Bp, DHp).astype(bf16)
    dec16_flat = dec_tm.reshape(T * Bp, DHp).astype(bf16)

    # --- (4) tanh(attention_fc(cat([c, dec]))) without the lane-axis concatenate,
    # flattened over (T*Bp) rows.
    hid = jnp.tanh(
        jnp.dot(c16, wc_ref[...], preferred_element_type=f32)
        + jnp.dot(dec16_flat, wd_ref[...], preferred_element_type=f32)
        + batt_ref[...])

    # --- (5) fc: one flattened matmul; time-major lane-dense logits store.
    # TODO(synk): for production V (>=8k) / v7x, tile the vocab with a ("parallel",)
    # grid over 128-lane blocks of wfc_t/bfc/logits and re-derive VMEM budget.
    logits = (jnp.dot(hid.astype(bf16), wfc_t_ref[...], preferred_element_type=f32)
              + bfc_ref[...])                                         # (T*Bp, Vp)
    logits_ref[...] = logits.reshape(T, Bp, Vp)


# --------------------------------------------------------------------------
# Wrapper: padding / weight-layout plumbing around the single pallas_call.
# --------------------------------------------------------------------------
def _round_up(x, m):
    return ((x + m - 1) // m) * m


def _pack_gru_gates(w, b, DH, DHp, din, din_p):
    """PyTorch GRU weight (3*DH, din) / bias (3*DH,) -> W^T with each gate block
    zero-padded to DHp lanes: (din_p, 3*DHp), (1, 3*DHp). Zero padding is exact."""
    wt = jnp.zeros((din_p, 3 * DHp), jnp.float32)
    bt = jnp.zeros((1, 3 * DHp), jnp.float32)
    for g in range(3):
        wt = wt.at[:din, g * DHp:g * DHp + DH].set(w[g * DH:(g + 1) * DH, :].T)
        bt = bt.at[0, g * DHp:g * DHp + DH].set(b[g * DH:(g + 1) * DH])
    return wt, bt


def decoder_forward(params, token_seq, enc_hidden_state, enc_output):
    """token_seq (B,Sd) int32, enc_hidden_state (B,DH), enc_output (B,Se,DH)."""
    B, Sd = token_seq.shape
    E = params['embedding'].shape[1]
    DH = params['w_hh'].shape[1]
    V = params['fc_w'].shape[0]

    Bp = _round_up(max(B, 8), 8)          # full sublane tiles in the recurrence
    DHp = _round_up(max(DH, 128), 128)    # vreg-aligned gate/hidden lanes
    Vp = _round_up(max(V, 128), 128)      # lane-dense logits store

    # Padded activations; padded rows/lanes are zeros and are sliced off below.
    tok_p = jnp.pad(token_seq.astype(jnp.int32), ((0, Bp - B), (0, 0)))
    h0_p = jnp.pad(enc_hidden_state.astype(jnp.float32),
                   ((0, Bp - B), (0, DHp - DH)))
    enc_p = jnp.pad(enc_output.astype(jnp.float32),
                    ((0, Bp - B), (0, 0), (0, DHp - DH))).astype(jnp.bfloat16)

    # Time-major, flattened embedding gather; bf16 at the MXU boundary.
    emb_flat = params['embedding'].astype(jnp.float32)[tok_p.T] \
        .reshape(Sd * Bp, E).astype(jnp.bfloat16)

    # GRU weights: transposed once, each gate block padded to DHp lanes.
    wih_t, bih = _pack_gru_gates(params['w_ih'].astype(jnp.float32),
                                 params['b_ih'].astype(jnp.float32), DH, DHp, E, E)
    whh_t, bhh = _pack_gru_gates(params['w_hh'].astype(jnp.float32),
                                 params['b_hh'].astype(jnp.float32), DH, DHp, DH, DHp)

    # attention_fc split: cat([c, dec]) @ W^T == c @ W[:, :DH]^T + dec @ W[:, DH:]^T
    att_w = params['att_w'].astype(jnp.float32)
    wc_t = jnp.zeros((DHp, DHp), jnp.float32).at[:DH, :DH].set(att_w[:, :DH].T)
    wd_t = jnp.zeros((DHp, DHp), jnp.float32).at[:DH, :DH].set(att_w[:, DH:].T)
    batt = jnp.zeros((1, DHp), jnp.float32).at[0, :DH].set(
        params['att_b'].astype(jnp.float32))

    # fc weight/bias padded to (DHp, Vp); padded rows/cols are zero.
    wfc_t = jnp.zeros((DHp, Vp), jnp.float32).at[:DH, :V].set(
        params['fc_w'].astype(jnp.float32).T)
    bfc = jnp.zeros((1, Vp), jnp.float32).at[0, :V].set(
        params['fc_b'].astype(jnp.float32))

    out_shape = (jax.ShapeDtypeStruct((Sd, Bp, Vp), jnp.float32),   # time-major logits
                 jax.ShapeDtypeStruct((Bp, DHp), jnp.float32))

    # Everything fits in VMEM at these sizes -> single invocation, no grid.
    # TODO(synk): at production sizes add a ("parallel",) vocab grid (v7x megacore)
    # and consider bf16 logits on v5e to cut store bytes.
    logits_tm, hn_p = pl.pallas_call(
        decoder_kernel,
        out_shape=out_shape,
        scratch_shapes=[pltpu.VMEM((Sd, Bp, DHp), jnp.float32)],
        compiler_params=pltpu.CompilerParams(vmem_limit_bytes=32 * 1024 * 1024),
    )(emb_flat, h0_p,
      wih_t.astype(jnp.bfloat16), whh_t.astype(jnp.bfloat16), bih, bhh,
      enc_p, wc_t.astype(jnp.bfloat16), wd_t.astype(jnp.bfloat16), batt,
      wfc_t.astype(jnp.bfloat16), bfc)

    logits = jnp.transpose(logits_tm, (1, 0, 2))[:B, :, :V]          # (B, Sd, V)
    hidden = hn_p[:B, :DH][None, :, :]                               # (1, B, DH) like PyTorch GRU
    return logits, hidden


# --------------------------------------------------------------------------
# Pure-JAX (f32) reference of the PyTorch Decoder forward, for validation.
# --------------------------------------------------------------------------
def decoder_reference(params, token_seq, enc_hidden, enc_output):
    emb = params['embedding'][token_seq]                               # (B, Sd, E)
    DH = params['w_hh'].shape[1]
    wih, whh = params['w_ih'], params['w_hh']
    bih, bhh = params['b_ih'], params['b_hh']

    def step(h, x_t):
        gi = x_t @ wih.T + bih
        gh = h @ whh.T + bhh
        r = jax.nn.sigmoid(gi[:, :DH] + gh[:, :DH])
        z = jax.nn.sigmoid(gi[:, DH:2 * DH] + gh[:, DH:2 * DH])
        n = jnp.tanh(gi[:, 2 * DH:] + r * gh[:, 2 * DH:])
        h = (1.0 - z) * n + z * h
        return h, h

    h_last, outs = lax.scan(step, enc_hidden, jnp.swapaxes(emb, 0, 1))
    dec = jnp.swapaxes(outs, 0, 1)                                     # (B, Sd, DH)

    a = jnp.einsum('bed,btd->bet', enc_output, dec)
    a = jax.nn.softmax(a, axis=1)
    c = jnp.einsum('bet,bed->btd', a, enc_output)
    cat = jnp.concatenate([c, dec], axis=-1)
    hid = jnp.tanh(cat @ params['att_w'].T + params['att_b'])
    logits = hid @ params['fc_w'].T + params['fc_b']
    return logits, h_last[None]


# --------------------------------------------------------------------------
# Deterministic parameter construction (PyTorch-equivalent shapes).
# --------------------------------------------------------------------------
def make_params(key, output_dim, embedding_dim, hidden_dim, cat_or_add='cat'):
    DH = hidden_dim if cat_or_add == 'add' else 2 * hidden_dim
    ks = jax.random.split(key, 9)
    u = lambda k, shape, s: jax.random.uniform(k, shape, jnp.float32, -s, s)
    sg = 1.0 / math.sqrt(DH)
    sa = 1.0 / math.sqrt(2 * DH)
    return {
        'embedding': u(ks[0], (output_dim, embedding_dim), 1.0),
        'w_ih': u(ks[1], (3 * DH, embedding_dim), sg),
        'w_hh': u(ks[2], (3 * DH, DH), sg),
        'b_ih': u(ks[3], (3 * DH,), sg),
        'b_hh': u(ks[4], (3 * DH,), sg),
        'att_w': u(ks[5], (DH, 2 * DH), sa),      # attention_fc: Linear(2*DH -> DH)
        'att_b': u(ks[6], (DH,), sa),
        'fc_w': u(ks[7], (output_dim, DH), sg),   # fc: Linear(DH -> output_dim)
        'fc_b': u(ks[8], (output_dim,), sg),
    }


if __name__ == "__main__":
    OUTPUT_DIM = 24          # decoder vocab
    EMB_DIM = 16
    HIDDEN = 16              # encoder hidden; dec_hidden_dim = 2*HIDDEN ('cat')
    B, S_DEC, S_ENC = 2, 6, 8
    DH = 2 * HIDDEN

    key = jax.random.PRNGKey(0)
    k_par, k_tok, k_hid, k_enc = jax.random.split(key, 4)
    params = make_params(k_par, OUTPUT_DIM, EMB_DIM, HIDDEN)
    token_seq = jax.random.randint(k_tok, (B, S_DEC), 0, OUTPUT_DIM, jnp.int32)
    enc_hidden = 0.1 * jax.random.normal(k_hid, (B, DH), jnp.float32)
    enc_output = 0.1 * jax.random.normal(k_enc, (B, S_ENC, DH), jnp.float32)

    fwd = jax.jit(decoder_forward)
    logits, hidden = fwd(params, token_seq, enc_hidden, enc_output)
    jax.block_until_ready((logits, hidden))

    assert logits.shape == (B, S_DEC, OUTPUT_DIM)
    assert hidden.shape == (1, B, DH)
    assert bool(jnp.all(jnp.isfinite(logits))) and bool(jnp.all(jnp.isfinite(hidden)))

    # Numerical check vs. f32 reference (loose tolerance: kernel uses bf16 MXU inputs
    # and an approx-reciprocal softmax denominator).
    ref_logits, ref_hidden = decoder_reference(params, token_seq, enc_hidden, enc_output)
    assert bool(jnp.allclose(logits, ref_logits, rtol=5e-2, atol=5e-2))
    assert bool(jnp.allclose(hidden, ref_hidden, rtol=5e-2, atol=5e-2))

    print("KERNEL_OK")
</pallas_src>

<mosaic_0001>
module attributes {stable_mosaic.version = 11 : i64} {
  func.func @decoder_kernel(%arg0: memref<48x16xbf16, #tpu.memory_space<vmem>>, %arg1: memref<8x128xf32, #tpu.memory_space<vmem>>, %arg2: memref<16x384xbf16, #tpu.memory_space<vmem>>, %arg3: memref<128x384xbf16, #tpu.memory_space<vmem>>, %arg4: memref<1x384xf32, #tpu.memory_space<vmem>>, %arg5: memref<1x384xf32, #tpu.memory_space<vmem>>, %arg6: memref<8x8x128xbf16, #tpu.memory_space<vmem>>, %arg7: memref<128x128xbf16, #tpu.memory_space<vmem>>, %arg8: memref<128x128xbf16, #tpu.memory_space<vmem>>, %arg9: memref<1x128xf32, #tpu.memory_space<vmem>>, %arg10: memref<128x128xbf16, #tpu.memory_space<vmem>>, %arg11: memref<1x128xf32, #tpu.memory_space<vmem>>, %arg12: memref<6x8x128xf32, #tpu.memory_space<vmem>>, %arg13: memref<8x128xf32, #tpu.memory_space<vmem>>, %arg14: memref<6x8x128xf32, #tpu.memory_space<vmem>>) attributes {dimension_semantics = [], scalar_prefetch = 0 : i64, scratch_operands = 1 : i64, tpu.core_type = #tpu.core_type<tc>} {
    %c0 = arith.constant 0 : index
    %c0_0 = arith.constant 0 : index
    %0 = vector.load %arg0[%c0, %c0_0] : memref<48x16xbf16, #tpu.memory_space<vmem>>, vector<48x16xbf16>
    %c0_1 = arith.constant 0 : index
    %c0_2 = arith.constant 0 : index
    %1 = vector.load %arg2[%c0_1, %c0_2] : memref<16x384xbf16, #tpu.memory_space<vmem>>, vector<16x384xbf16>
    %cst = arith.constant dense<0.000000e+00> : vector<48x384xf32>
    %2 = tpu.matmul %0, %1, %cst {dimension_numbers = #tpu.dot_dimension_numbers<[1], [0], [0], [1], [0, 0, 1, 1], [], []>} : vector<48x16xbf16>, vector<16x384xbf16>, vector<48x384xf32> -> vector<48x384xf32>
    %c0_3 = arith.constant 0 : index
    %c0_4 = arith.constant 0 : index
    %3 = vector.load %arg4[%c0_3, %c0_4] : memref<1x384xf32, #tpu.memory_space<vmem>>, vector<1x384xf32>
    %4 = vector.broadcast %3 : vector<1x384xf32> to vector<48x384xf32>
    %5 = arith.addf %2, %4 : vector<48x384xf32>
    %6 = vector.shape_cast %5 : vector<48x384xf32> to vector<6x8x384xf32>
    %c0_5 = arith.constant 0 : index
    %c0_6 = arith.constant 0 : index
    %7 = vector.load %arg3[%c0_5, %c0_6] : memref<128x384xbf16, #tpu.memory_space<vmem>>, vector<128x384xbf16>
    %c0_7 = arith.constant 0 : index
    %c0_8 = arith.constant 0 : index
    %8 = vector.load %arg5[%c0_7, %c0_8] : memref<1x384xf32, #tpu.memory_space<vmem>>, vector<1x384xf32>
    %c0_9 = arith.constant 0 : index
    %c0_10 = arith.constant 0 : index
    %9 = vector.load %arg1[%c0_9, %c0_10] : memref<8x128xf32, #tpu.memory_space<vmem>>, vector<8x128xf32>
    %10 = vector.extract_strided_slice %6 {offsets = [0, 0, 0], sizes = [1, 8, 384], strides = [1, 1, 1]} : vector<6x8x384xf32> to vector<1x8x384xf32>
    %11 = vector.shape_cast %10 : vector<1x8x384xf32> to vector<8x384xf32>
    %12 = arith.truncf %9 : vector<8x128xf32> to vector<8x128xbf16>
    %cst_11 = arith.constant dense<0.000000e+00> : vector<8x384xf32>
    %13 = tpu.matmul %12, %7, %cst_11 {dimension_numbers = #tpu.dot_dimension_numbers<[1], [0], [0], [1], [0, 0, 1, 1], [], []>} : vector<8x128xbf16>, vector<128x384xbf16>, vector<8x384xf32> -> vector<8x384xf32>
    %14 = vector.broadcast %8 : vector<1x384xf32> to vector<8x384xf32>
    %15 = arith.addf %13, %14 : vector<8x384xf32>
    %16 = vector.extract_strided_slice %11 {offsets = [0, 0], sizes = [8, 256], strides = [1, 1]} : vector<8x384xf32> to vector<8x256xf32>
    %17 = vector.extract_strided_slice %15 {offsets = [0, 0], sizes = [8, 256], strides = [1, 1]} : vector<8x384xf32> to vector<8x256xf32>
    %18 = arith.addf %16, %17 : vector<8x256xf32>
    %19 = arith.negf %18 : vector<8x256xf32>
    %20 = math.exp %19 : vector<8x256xf32>
    %cst_12 = arith.constant 1.000000e+00 : f32
    %21 = vector.broadcast %cst_12 : f32 to vector<8x256xf32>
    %22 = arith.addf %21, %20 : vector<8x256xf32>
    %23 = arith.divf %21, %22 : vector<8x256xf32>
    %24 = vector.extract_strided_slice %23 {offsets = [0, 0], sizes = [8, 128], strides = [1, 1]} : vector<8x256xf32> to vector<8x128xf32>
    %25 = vector.extract_strided_slice %23 {offsets = [0, 128], sizes = [8, 128], strides = [1, 1]} : vector<8x256xf32> to vector<8x128xf32>
    %26 = vector.extract_strided_slice %11 {offsets = [0, 256], sizes = [8, 128], strides = [1, 1]} : vector<8x384xf32> to vector<8x128xf32>
    %27 = vector.extract_strided_slice %15 {offsets = [0, 256], sizes = [8, 128], strides = [1, 1]} : vector<8x384xf32> to vector<8x128xf32>
    %28 = arith.mulf %24, %27 : vector<8x128xf32>
    %29 = arith.addf %26, %28 : vector<8x128xf32>
    %30 = math.tanh %29 : vector<8x128xf32>
    %cst_13 = arith.constant 1.000000e+00 : f32
    %31 = vector.broadcast %cst_13 : f32 to vector<8x128xf32>
    %32 = arith.subf %31, %25 : vector<8x128xf32>
    %33 = arith.mulf %32, %30 : vector<8x128xf32>
    %34 = arith.mulf %25, %9 : vector<8x128xf32>
    %35 = arith.addf %33, %34 : vector<8x128xf32>
    %c0_14 = arith.constant 0 : index
    %c0_15 = arith.constant 0 : index
    %c0_16 = arith.constant 0 : index
    %36 = vector.load %arg14[%c0_14, %c0_15, %c0_16] : memref<6x8x128xf32, #tpu.memory_space<vmem>>, vector<1x8x128xf32>
    %37 = vector.shape_cast %36 : vector<1x8x128xf32> to vector<8x128xf32>
    %38 = vector.shape_cast %35 : vector<8x128xf32> to vector<1x8x128xf32>
    tpu.vector_store %arg14[%c0_14, %c0_15, %c0_16], %38 {strides = array<i32>} : memref<6x8x128xf32, #tpu.memory_space<vmem>>, vector<1x8x128xf32>,
    %39 = vector.extract_strided_slice %6 {offsets = [1, 0, 0], sizes = [1, 8, 384], strides = [1, 1, 1]} : vector<6x8x384xf32> to vector<1x8x384xf32>
    %40 = vector.shape_cast %39 : vector<1x8x384xf32> to vector<8x384xf32>
    %41 = arith.truncf %35 : vector<8x128xf32> to vector<8x128xbf16>
    %cst_17 = arith.constant dense<0.000000e+00> : vector<8x384xf32>
    %42 = tpu.matmul %41, %7, %cst_17 {dimension_numbers = #tpu.dot_dimension_numbers<[1], [0], [0], [1], [0, 0, 1, 1], [], []>} : vector<8x128xbf16>, vector<128x384xbf16>, vector<8x384xf32> -> vector<8x384xf32>
    %43 = vector.broadcast %8 : vector<1x384xf32> to vector<8x384xf32>
    %44 = arith.addf %42, %43 : vector<8x384xf32>
    %45 = vector.extract_strided_slice %40 {offsets = [0, 0], sizes = [8, 256], strides = [1, 1]} : vector<8x384xf32> to vector<8x256xf32>
    %46 = vector.extract_strided_slice %44 {offsets = [0, 0], sizes = [8, 256], strides = [1, 1]} : vector<8x384xf32> to vector<8x256xf32>
    %47 = arith.addf %45, %46 : vector<8x256xf32>
    %48 = arith.negf %47 : vector<8x256xf32>
    %49 = math.exp %48 : vector<8x256xf32>
    %cst_18 = arith.constant 1.000000e+00 : f32
    %50 = vector.broadcast %cst_18 : f32 to vector<8x256xf32>
    %51 = arith.addf %50, %49 : vector<8x256xf32>
    %52 = arith.divf %50, %51 : vector<8x256xf32>
    %53 = vector.extract_strided_slice %52 {offsets = [0, 0], sizes = [8, 128], strides = [1, 1]} : vector<8x256xf32> to vector<8x128xf32>
    %54 = vector.extract_strided_slice %52 {offsets = [0, 128], sizes = [8, 128], strides = [1, 1]} : vector<8x256xf32> to vector<8x128xf32>
    %55 = vector.extract_strided_slice %40 {offsets = [0, 256], sizes = [8, 128], strides = [1, 1]} : vector<8x384xf32> to vector<8x128xf32>
    %56 = vector.extract_strided_slice %44 {offsets = [0, 256], sizes = [8, 128], strides = [1, 1]} : vector<8x384xf32> to vector<8x128xf32>
    %57 = arith.mulf %53, %56 : vector<8x128xf32>
    %58 = arith.addf %55, %57 : vector<8x128xf32>
    %59 = math.tanh %58 : vector<8x128xf32>
    %cst_19 = arith.constant 1.000000e+00 : f32
    %60 = vector.broadcast %cst_19 : f32 to vector<8x128xf32>
    %61 = arith.subf %60, %54 : vector<8x128xf32>
    %62 = arith.mulf %61, %59 : vector<8x128xf32>
    %63 = arith.mulf %54, %35 : vector<8x128xf32>
    %64 = arith.addf %62, %63 : vector<8x128xf32>
    %c1 = arith.constant 1 : index
    %c0_20 = arith.constant 0 : index
    %c0_21 = arith.constant 0 : index
    %65 = vector.load %arg14[%c1, %c0_20, %c0_21] : memref<6x8x128xf32, #tpu.memory_space<vmem>>, vector<1x8x128xf32>
    %66 = vector.shape_cast %65 : vector<1x8x128xf32> to vector<8x128xf32>
    %67 = vector.shape_cast %64 : vector<8x128xf32> to vector<1x8x128xf32>
    tpu.vector_store %arg14[%c1, %c0_20, %c0_21], %67 {strides = array<i32>} : memref<6x8x128xf32, #tpu.memory_space<vmem>>, vector<1x8x128xf32>,
    %68 = vector.extract_strided_slice %6 {offsets = [2, 0, 0], sizes = [1, 8, 384], strides = [1, 1, 1]} : vector<6x8x384xf32> to vector<1x8x384xf32>
    %69 = vector.shape_cast %68 : vector<1x8x384xf32> to vector<8x384xf32>
    %70 = arith.truncf %64 : vector<8x128xf32> to vector<8x128xbf16>
    %cst_22 = arith.constant dense<0.000000e+00> : vector<8x384xf32>
    %71 = tpu.matmul %70, %7, %cst_22 {dimension_numbers = #tpu.dot_dimension_numbers<[1], [0], [0], [1], [0, 0, 1, 1], [], []>} : vector<8x128xbf16>, vector<128x384xbf16>, vector<8x384xf32> -> vector<8x384xf32>
    %72 = vector.broadcast %8 : vector<1x384xf32> to vector<8x384xf32>
    %73 = arith.addf %71, %72 : vector<8x384xf32>
    %74 = vector.extract_strided_slice %69 {offsets = [0, 0], sizes = [8, 256], strides = [1, 1]} : vector<8x384xf32> to vector<8x256xf32>
    %75 = vector.extract_strided_slice %73 {offsets = [0, 0], sizes = [8, 256], strides = [1, 1]} : vector<8x384xf32> to vector<8x256xf32>
    %76 = arith.addf %74, %75 : vector<8x256xf32>
    %77 = arith.negf %76 : vector<8x256xf32>
    %78 = math.exp %77 : vector<8x256xf32>
    %cst_23 = arith.constant 1.000000e+00 : f32
    %79 = vector.broadcast %cst_23 : f32 to vector<8x256xf32>
    %80 = arith.addf %79, %78 : vector<8x256xf32>
    %81 = arith.divf %79, %80 : vector<8x256xf32>
    %82 = vector.extract_strided_slice %81 {offsets = [0, 0], sizes = [8, 128], strides = [1, 1]} : vector<8x256xf32> to vector<8x128xf32>
    %83 = vector.extract_strided_slice %81 {offsets = [0, 128], sizes = [8, 128], strides = [1, 1]} : vector<8x256xf32> to vector<8x128xf32>
    %84 = vector.extract_strided_slice %69 {offsets = [0, 256], sizes = [8, 128], strides = [1, 1]} : vector<8x384xf32> to vector<8x128xf32>
    %85 = vector.extract_strided_slice %73 {offsets = [0, 256], sizes = [8, 128], strides = [1, 1]} : vector<8x384xf32> to vector<8x128xf32>
    %86 = arith.mulf %82, %85 : vector<8x128xf32>
    %87 = arith.addf %84, %86 : vector<8x128xf32>
    %88 = math.tanh %87 : vector<8x128xf32>
    %cst_24 = arith.constant 1.000000e+00 : f32
    %89 = vector.broadcast %cst_24 : f32 to vector<8x128xf32>
    %90 = arith.subf %89, %83 : vector<8x128xf32>
    %91 = arith.mulf %90, %88 : vector<8x128xf32>
    %92 = arith.mulf %83, %64 : vector<8x128xf32>
    %93 = arith.addf %91, %92 : vector<8x128xf32>
    %c2 = arith.constant 2 : index
    %c0_25 = arith.constant 0 : index
    %c0_26 = arith.constant 0 : index
    %94 = vector.load %arg14[%c2, %c0_25, %c0_26] : memref<6x8x128xf32, #tpu.memory_space<vmem>>, vector<1x8x128xf32>
    %95 = vector.shape_cast %94 : vector<1x8x128xf32> to vector<8x128xf32>
    %96 = vector.shape_cast %93 : vector<8x128xf32> to vector<1x8x128xf32>
    tpu.vector_store %arg14[%c2, %c0_25, %c0_26], %96 {strides = array<i32>} : memref<6x8x128xf32, #tpu.memory_space<vmem>>, vector<1x8x128xf32>,
    %97 = vector.extract_strided_slice %6 {offsets = [3, 0, 0], sizes = [1, 8, 384], strides = [1, 1, 1]} : vector<6x8x384xf32> to vector<1x8x384xf32>
    %98 = vector.shape_cast %97 : vector<1x8x384xf32> to vector<8x384xf32>
    %99 = arith.truncf %93 : vector<8x128xf32> to vector<8x128xbf16>
    %cst_27 = arith.constant dense<0.000000e+00> : vector<8x384xf32>
    %100 = tpu.matmul %99, %7, %cst_27 {dimension_numbers = #tpu.dot_dimension_numbers<[1], [0], [0], [1], [0, 0, 1, 1], [], []>} : vector<8x128xbf16>, vector<128x384xbf16>, vector<8x384xf32> -> vector<8x384xf32>
    %101 = vector.broadcast %8 : vector<1x384xf32> to vector<8x384xf32>
    %102 = arith.addf %100, %101 : vector<8x384xf32>
    %103 = vector.extract_strided_slice %98 {offsets = [0, 0], sizes = [8, 256], strides = [1, 1]} : vector<8x384xf32> to vector<8x256xf32>
    %104 = vector.extract_strided_slice %102 {offsets = [0, 0], sizes = [8, 256], strides = [1, 1]} : vector<8x384xf32> to vector<8x256xf32>
    %105 = arith.addf %103, %104 : vector<8x256xf32>
    %106 = arith.negf %105 : vector<8x256xf32>
    %107 = math.exp %106 : vector<8x256xf32>
    %cst_28 = arith.constant 1.000000e+00 : f32
    %108 = vector.broadcast %cst_28 : f32 to vector<8x256xf32>
    %109 = arith.addf %108, %107 : vector<8x256xf32>
    %110 = arith.divf %108, %109 : vector<8x256xf32>
    %111 = vector.extract_strided_slice %110 {offsets = [0, 0], sizes = [8, 128], strides = [1, 1]} : vector<8x256xf32> to vector<8x128xf32>
    %112 = vector.extract_strided_slice %110 {offsets = [0, 128], sizes = [8, 128], strides = [1, 1]} : vector<8x256xf32> to vector<8x128xf32>
    %113 = vector.extract_strided_slice %98 {offsets = [0, 256], sizes = [8, 128], strides = [1, 1]} : vector<8x384xf32> to vector<8x128xf32>
    %114 = vector.extract_strided_slice %102 {offsets = [0, 256], sizes = [8, 128], strides = [1, 1]} : vector<8x384xf32> to vector<8x128xf32>
    %115 = arith.mulf %111, %114 : vector<8x128xf32>
    %116 = arith.addf %113, %115 : vector<8x128xf32>
    %117 = math.tanh %116 : vector<8x128xf32>
    %cst_29 = arith.constant 1.000000e+00 : f32
    %118 = vector.broadcast %cst_29 : f32 to vector<8x128xf32>
    %119 = arith.subf %118, %112 : vector<8x128xf32>
    %120 = arith.mulf %119, %117 : vector<8x128xf32>
    %121 = arith.mulf %112, %93 : vector<8x128xf32>
    %122 = arith.addf %120, %121 : vector<8x128xf32>
    %c3 = arith.constant 3 : index
    %c0_30 = arith.constant 0 : index
    %c0_31 = arith.constant 0 : index
    %123 = vector.load %arg14[%c3, %c0_30, %c0_31] : memref<6x8x128xf32, #tpu.memory_space<vmem>>, vector<1x8x128xf32>
    %124 = vector.shape_cast %123 : vector<1x8x128xf32> to vector<8x128xf32>
    %125 = vector.shape_cast %122 : vector<8x128xf32> to vector<1x8x128xf32>
    tpu.vector_store %arg14[%c3, %c0_30, %c0_31], %125 {strides = array<i32>} : memref<6x8x128xf32, #tpu.memory_space<vmem>>, vector<1x8x128xf32>,
    %126 = vector.extract_strided_slice %6 {offsets = [4, 0, 0], sizes = [1, 8, 384], strides = [1, 1, 1]} : vector<6x8x384xf32> to vector<1x8x384xf32>
    %127 = vector.shape_cast %126 : vector<1x8x384xf32> to vector<8x384xf32>
    %128 = arith.truncf %122 : vector<8x128xf32> to vector<8x128xbf16>
    %cst_32 = arith.constant dense<0.000000e+00> : vector<8x384xf32>
    %129 = tpu.matmul %128, %7, %cst_32 {dimension_numbers = #tpu.dot_dimension_numbers<[1], [0], [0], [1], [0, 0, 1, 1], [], []>} : vector<8x128xbf16>, vector<128x384xbf16>, vector<8x384xf32> -> vector<8x384xf32>
    %130 = vector.broadcast %8 : vector<1x384xf32> to vector<8x384xf32>
    %131 = arith.addf %129, %130 : vector<8x384xf32>
    %132 = vector.extract_strided_slice %127 {offsets = [0, 0], sizes = [8, 256], strides = [1, 1]} : vector<8x384xf32> to vector<8x256xf32>
    %133 = vector.extract_strided_slice %131 {offsets = [0, 0], sizes = [8, 256], strides = [1, 1]} : vector<8x384xf32> to vector<8x256xf32>
    %134 = arith.addf %132, %133 : vector<8x256xf32>
    %135 = arith.negf %134 : vector<8x256xf32>
    %136 = math.exp %135 : vector<8x256xf32>
    %cst_33 = arith.constant 1.000000e+00 : f32
    %137 = vector.broadcast %cst_33 : f32 to vector<8x256xf32>
    %138 = arith.addf %137, %136 : vector<8x256xf32>
    %139 = arith.divf %137, %138 : vector<8x256xf32>
    %140 = vector.extract_strided_slice %139 {offsets = [0, 0], sizes = [8, 128], strides = [1, 1]} : vector<8x256xf32> to vector<8x128xf32>
    %141 = vector.extract_strided_slice %139 {offsets = [0, 128], sizes = [8, 128], strides = [1, 1]} : vector<8x256xf32> to vector<8x128xf32>
    %142 = vector.extract_strided_slice %127 {offsets = [0, 256], sizes = [8, 128], strides = [1, 1]} : vector<8x384xf32> to vector<8x128xf32>
    %143 = vector.extract_strided_slice %131 {offsets = [0, 256], sizes = [8, 128], strides = [1, 1]} : vector<8x384xf32> to vector<8x128xf32>
    %144 = arith.mulf %140, %143 : vector<8x128xf32>
    %145 = arith.addf %142, %144 : vector<8x128xf32>
    %146 = math.tanh %145 : vector<8x128xf32>
    %cst_34 = arith.constant 1.000000e+00 : f32
    %147 = vector.broadcast %cst_34 : f32 to vector<8x128xf32>
    %148 = arith.subf %147, %141 : vector<8x128xf32>
    %149 = arith.mulf %148, %146 : vector<8x128xf32>
    %150 = arith.mulf %141, %122 : vector<8x128xf32>
    %151 = arith.addf %149, %150 : vector<8x128xf32>
    %c4 = arith.constant 4 : index
    %c0_35 = arith.constant 0 : index
    %c0_36 = arith.constant 0 : index
    %152 = vector.load %arg14[%c4, %c0_35, %c0_36] : memref<6x8x128xf32, #tpu.memory_space<vmem>>, vector<1x8x128xf32>
    %153 = vector.shape_cast %152 : vector<1x8x128xf32> to vector<8x128xf32>
    %154 = vector.shape_cast %151 : vector<8x128xf32> to vector<1x8x128xf32>
    tpu.vector_store %arg14[%c4, %c0_35, %c0_36], %154 {strides = array<i32>} : memref<6x8x128xf32, #tpu.memory_space<vmem>>, vector<1x8x128xf32>,
    %155 = vector.extract_strided_slice %6 {offsets = [5, 0, 0], sizes = [1, 8, 384], strides = [1, 1, 1]} : vector<6x8x384xf32> to vector<1x8x384xf32>
    %156 = vector.shape_cast %155 : vector<1x8x384xf32> to vector<8x384xf32>
    %157 = arith.truncf %151 : vector<8x128xf32> to vector<8x128xbf16>
    %cst_37 = arith.constant dense<0.000000e+00> : vector<8x384xf32>
    %158 = tpu.matmul %157, %7, %cst_37 {dimension_numbers = #tpu.dot_dimension_numbers<[1], [0], [0], [1], [0, 0, 1, 1], [], []>} : vector<8x128xbf16>, vector<128x384xbf16>, vector<8x384xf32> -> vector<8x384xf32>
    %159 = vector.broadcast %8 : vector<1x384xf32> to vector<8x384xf32>
    %160 = arith.addf %158, %159 : vector<8x384xf32>
    %161 = vector.extract_strided_slice %156 {offsets = [0, 0], sizes = [8, 256], strides = [1, 1]} : vector<8x384xf32> to vector<8x256xf32>
    %162 = vector.extract_strided_slice %160 {offsets = [0, 0], sizes = [8, 256], strides = [1, 1]} : vector<8x384xf32> to vector<8x256xf32>
    %163 = arith.addf %161, %162 : vector<8x256xf32>
    %164 = arith.negf %163 : vector<8x256xf32>
    %165 = math.exp %164 : vector<8x256xf32>
    %cst_38 = arith.constant 1.000000e+00 : f32
    %166 = vector.broadcast %cst_38 : f32 to vector<8x256xf32>
    %167 = arith.addf %166, %165 : vector<8x256xf32>
    %168 = arith.divf %166, %167 : vector<8x256xf32>
    %169 = vector.extract_strided_slice %168 {offsets = [0, 0], sizes = [8, 128], strides = [1, 1]} : vector<8x256xf32> to vector<8x128xf32>
    %170 = vector.extract_strided_slice %168 {offsets = [0, 128], sizes = [8, 128], strides = [1, 1]} : vector<8x256xf32> to vector<8x128xf32>
    %171 = vector.extract_strided_slice %156 {offsets = [0, 256], sizes = [8, 128], strides = [1, 1]} : vector<8x384xf32> to vector<8x128xf32>
    %172 = vector.extract_strided_slice %160 {offsets = [0, 256], sizes = [8, 128], strides = [1, 1]} : vector<8x384xf32> to vector<8x128xf32>
    %173 = arith.mulf %169, %172 : vector<8x128xf32>
    %174 = arith.addf %171, %173 : vector<8x128xf32>
    %175 = math.tanh %174 : vector<8x128xf32>
    %cst_39 = arith.constant 1.000000e+00 : f32
    %176 = vector.broadcast %cst_39 : f32 to vector<8x128xf32>
    %177 = arith.subf %176, %170 : vector<8x128xf32>
    %178 = arith.mulf %177, %175 : vector<8x128xf32>
    %179 = arith.mulf %170, %151 : vector<8x128xf32>
    %180 = arith.addf %178, %179 : vector<8x128xf32>
    %c5 = arith.constant 5 : index
    %c0_40 = arith.constant 0 : index
    %c0_41 = arith.constant 0 : index
    %181 = vector.load %arg14[%c5, %c0_40, %c0_41] : memref<6x8x128xf32, #tpu.memory_space<vmem>>, vector<1x8x128xf32>
    %182 = vector.shape_cast %181 : vector<1x8x128xf32> to vector<8x128xf32>
    %183 = vector.shape_cast %180 : vector<8x128xf32> to vector<1x8x128xf32>
    tpu.vector_store %arg14[%c5, %c0_40, %c0_41], %183 {strides = array<i32>} : memref<6x8x128xf32, #tpu.memory_space<vmem>>, vector<1x8x128xf32>,
    %c0_42 = arith.constant 0 : index
    %c0_43 = arith.constant 0 : index
    %184 = vector.load %arg13[%c0_42, %c0_43] : memref<8x128xf32, #tpu.memory_space<vmem>>, vector<8x128xf32>
    tpu.vector_store %arg13[%c0_42, %c0_43], %180 {strides = array<i32>} : memref<8x128xf32, #tpu.memory_space<vmem>>, vector<8x128xf32>,
    %c0_44 = arith.constant 0 : index
    %c0_45 = arith.constant 0 : index
    %c0_46 = arith.constant 0 : index
    %185 = vector.load %arg14[%c0_44, %c0_45, %c0_46] : memref<6x8x128xf32, #tpu.memory_space<vmem>>, vector<6x8x128xf32>
    %186 = tpu.transpose %185, [1, 0, 2] : vector<6x8x128xf32> -> vector<8x6x128xf32>
    %187 = arith.truncf %186 : vector<8x6x128xf32> to vector<8x6x128xbf16>
    %c0_47 = arith.constant 0 : index
    %c0_48 = arith.constant 0 : index
    %c0_49 = arith.constant 0 : index
    %188 = vector.load %arg6[%c0_47, %c0_48, %c0_49] : memref<8x8x128xbf16, #tpu.memory_space<vmem>>, vector<8x8x128xbf16>
    "tpu.trace_start"() <{level = 10 : i32, message = "btd,bed->bte"}> : () -> ()
    %cst_50 = arith.constant dense<0.000000e+00> : vector<8x6x8xf32>
    %189 = tpu.matmul %187, %188, %cst_50 {dimension_numbers = #tpu.dot_dimension_numbers<[2], [2], [1], [1], [0, 0, 0, 1, 1, 1], [0], [0]>} : vector<8x6x128xbf16>, vector<8x8x128xbf16>, vector<8x6x8xf32> -> vector<8x6x8xf32>
    "tpu.trace_stop"() : () -> ()
    %cst_51 = arith.constant dense<0xFF800000> : vector<8x6xf32>
    %190 = vector.multi_reduction <maximumf>, %189, %cst_51 [2] : vector<8x6x8xf32> to vector<8x6xf32>
    %191 = vector.shape_cast %190 : vector<8x6xf32> to vector<8x6x1xf32>
    %192 = vector.broadcast %191 : vector<8x6x1xf32> to vector<8x6x8xf32>
    %193 = arith.subf %189, %192 : vector<8x6x8xf32>
    %194 = math.exp %193 : vector<8x6x8xf32>
    %cst_52 = arith.constant dense<0.000000e+00> : vector<8x6xf32>
    %195 = vector.multi_reduction <add>, %194, %cst_52 [2] : vector<8x6x8xf32> to vector<8x6xf32>
    %196 = vector.shape_cast %195 : vector<8x6xf32> to vector<8x6x1xf32>
    %197 = tpu.reciprocal %196 {approx = true} : vector<8x6x1xf32> -> vector<8x6x1xf32>
    %198 = vector.broadcast %197 : vector<8x6x1xf32> to vector<8x6x8xf32>
    %199 = arith.mulf %194, %198 : vector<8x6x8xf32>
    %200 = arith.truncf %199 : vector<8x6x8xf32> to vector<8x6x8xbf16>
    "tpu.trace_start"() <{level = 10 : i32, message = "bte,bed->btd"}> : () -> ()
    %cst_53 = arith.constant dense<0.000000e+00> : vector<8x6x128xf32>
    %201 = tpu.matmul %200, %188, %cst_53 {dimension_numbers = #tpu.dot_dimension_numbers<[2], [1], [1], [2], [0, 0, 0, 1, 1, 2], [0], [0]>} : vector<8x6x8xbf16>, vector<8x8x128xbf16>, vector<8x6x128xf32> -> vector<8x6x128xf32>
    "tpu.trace_stop"() : () -> ()
    %202 = tpu.transpose %201, [1, 0, 2] : vector<8x6x128xf32> -> vector<6x8x128xf32>
    %203 = vector.shape_cast %202 : vector<6x8x128xf32> to vector<48x128xf32>
    %204 = arith.truncf %203 : vector<48x128xf32> to vector<48x128xbf16>
    %205 = vector.shape_cast %185 : vector<6x8x128xf32> to vector<48x128xf32>
    %206 = arith.truncf %205 : vector<48x128xf32> to vector<48x128xbf16>
    %c0_54 = arith.constant 0 : index
    %c0_55 = arith.constant 0 : index
    %207 = vector.load %arg7[%c0_54, %c0_55] : memref<128x128xbf16, #tpu.memory_space<vmem>>, vector<128x128xbf16>
    %cst_56 = arith.constant dense<0.000000e+00> : vector<48x128xf32>
    %208 = tpu.matmul %204, %207, %cst_56 {dimension_numbers = #tpu.dot_dimension_numbers<[1], [0], [0], [1], [0, 0, 1, 1], [], []>} : vector<48x128xbf16>, vector<128x128xbf16>, vector<48x128xf32> -> vector<48x128xf32>
    %c0_57 = arith.constant 0 : index
    %c0_58 = arith.constant 0 : index
    %209 = vector.load %arg8[%c0_57, %c0_58] : memref<128x128xbf16, #tpu.memory_space<vmem>>, vector<128x128xbf16>
    %cst_59 = arith.constant dense<0.000000e+00> : vector<48x128xf32>
    %210 = tpu.matmul %206, %209, %cst_59 {dimension_numbers = #tpu.dot_dimension_numbers<[1], [0], [0], [1], [0, 0, 1, 1], [], []>} : vector<48x128xbf16>, vector<128x128xbf16>, vector<48x128xf32> -> vector<48x128xf32>
    %211 = arith.addf %208, %210 : vector<48x128xf32>
    %c0_60 = arith.constant 0 : index
    %c0_61 = arith.constant 0 : index
    %212 = vector.load %arg9[%c0_60, %c0_61] : memref<1x128xf32, #tpu.memory_space<vmem>>, vector<1x128xf32>
    %213 = vector.broadcast %212 : vector<1x128xf32> to vector<48x128xf32>
    %214 = arith.addf %211, %213 : vector<48x128xf32>
    %215 = math.tanh %214 : vector<48x128xf32>
    %216 = arith.truncf %215 : vector<48x128xf32> to vector<48x128xbf16>
    %c0_62 = arith.constant 0 : index
    %c0_63 = arith.constant 0 : index
    %217 = vector.load %arg10[%c0_62, %c0_63] : memref<128x128xbf16, #tpu.memory_space<vmem>>, vector<128x128xbf16>
    %cst_64 = arith.constant dense<0.000000e+00> : vector<48x128xf32>
    %218 = tpu.matmul %216, %217, %cst_64 {dimension_numbers = #tpu.dot_dimension_numbers<[1], [0], [0], [1], [0, 0, 1, 1], [], []>} : vector<48x128xbf16>, vector<128x128xbf16>, vector<48x128xf32> -> vector<48x128xf32>
    %c0_65 = arith.constant 0 : index
    %c0_66 = arith.constant 0 : index
    %219 = vector.load %arg11[%c0_65, %c0_66] : memref<1x128xf32, #tpu.memory_space<vmem>>, vector<1x128xf32>
    %220 = vector.broadcast %219 : vector<1x128xf32> to vector<48x128xf32>
    %221 = arith.addf %218, %220 : vector<48x128xf32>
    %222 = vector.shape_cast %221 : vector<48x128xf32> to vector<6x8x128xf32>
    %c0_67 = arith.constant 0 : index
    %c0_68 = arith.constant 0 : index
    %c0_69 = arith.constant 0 : index
    %223 = vector.load %arg12[%c0_67, %c0_68, %c0_69] : memref<6x8x128xf32, #tpu.memory_space<vmem>>, vector<6x8x128xf32>
    tpu.vector_store %arg12[%c0_67, %c0_68, %c0_69], %222 {strides = array<i32>} : memref<6x8x128xf32, #tpu.memory_space<vmem>>, vector<6x8x128xf32>,
    return
  }
}

</mosaic_0001>

<llo_original>
// kernel: decoder_forward.1
$region0: #{decoder_forward.1}
  #allocation0 [shape = 'u32[]', space=smem, size = 0x4, offset = 0x4, fixed_abs, tag = 'smem constant byte address 0x4 - core index']
  #allocation1 [shape = 'u32[144,128]{1,0:T(1,128)}', space=vmem, size = 0x12000, scoped, tag = 'internal scratch']
  #allocation2 [shape = 'f32[6,8,128]{2,1,0:T(8,128)}', space=vmem, size = 0x6000, scoped, tag = 'scratch operand']
  %s0 = inlined_call_operand.vmem [shape: bf16[48,16], index: 0, kind: input, shape index: {}]
  %s1 = inlined_call_operand.vmem [shape: f32[8,128], index: 1, kind: input, shape index: {}]
  %s2 = inlined_call_operand.vmem [shape: bf16[16,384], index: 2, kind: input, shape index: {}]
  %s3 = inlined_call_operand.vmem [shape: bf16[128,384], index: 3, kind: input, shape index: {}]
  %s4 = inlined_call_operand.vmem [shape: f32[1,384], index: 4, kind: input, shape index: {}]
  %s5 = inlined_call_operand.vmem [shape: f32[1,384], index: 5, kind: input, shape index: {}]
  %s6 = inlined_call_operand.vmem [shape: bf16[8,8,128], index: 6, kind: input, shape index: {}]
  %s7 = inlined_call_operand.vmem [shape: bf16[128,128], index: 7, kind: input, shape index: {}]
  %s8 = inlined_call_operand.vmem [shape: bf16[128,128], index: 8, kind: input, shape index: {}]
  %s9 = inlined_call_operand.vmem [shape: f32[1,128], index: 9, kind: input, shape index: {}]
  %s10 = inlined_call_operand.vmem [shape: bf16[128,128], index: 10, kind: input, shape index: {}]
  %s11 = inlined_call_operand.vmem [shape: f32[1,128], index: 11, kind: input, shape index: {}]
  %s12 = inlined_call_operand.vmem [shape: f32[6,8,128], index: 12, kind: output, shape index: {0}]
  %s13 = inlined_call_operand.vmem [shape: f32[8,128], index: 13, kind: output, shape index: {1}]
  %14 = xla_tuple %s12, %s13
  %s15 = sld [smem:[#allocation0]]
  $region66: #{decoder_forward.1} parent=0
    _
  %s17 = ssub.s32 1, %s15
  %s18 = scalar_select 0, %s17, %s15
  // Predicated region
  $region2: #{decoder_forward.1} parent=0 // pred_check
    _
  $region3: #{decoder_forward.1} parent=0 // pred_check_branch
    %20 = sbr.rel (0) target = $region5
  $region4: #{decoder_forward.1} parent=0 // pred_region
    _
  $region5: #{decoder_forward.1} parent=0 // pred_fallthru
    _
  // Predicated region
  $region6: #{decoder_forward.1} parent=0 // pred_check
    _
  $region7: #{decoder_forward.1} parent=0 // pred_check_branch
    %22 = sbr.rel (0) target = $region9
  $region8: #{decoder_forward.1} parent=0 // pred_region
    _
  $region9: #{decoder_forward.1} parent=0 // pred_fallthru
    _
  // Predicated region
  $region10: #{decoder_forward.1} parent=0 // pred_check
    _
  $region11: #{decoder_forward.1} parent=0 // pred_check_branch
    %24 = sbr.rel (0) target = $region13
  $region12: #{decoder_forward.1} parent=0 // pred_region
    _
  $region13: #{decoder_forward.1} parent=0 // pred_fallthru
    _
  // Predicated region
  $region14: #{decoder_forward.1} parent=0 // pred_check
    _
  $region15: #{decoder_forward.1} parent=0 // pred_check_branch
    %26 = sbr.rel (0) target = $region17
  $region16: #{decoder_forward.1} parent=0 // pred_region
    _
  $region17: #{decoder_forward.1} parent=0 // pred_fallthru
    _
  // Predicated region
  $region18: #{decoder_forward.1} parent=0 // pred_check
    _
  $region19: #{decoder_forward.1} parent=0 // pred_check_branch
    %28 = sbr.rel (0) target = $region21
  $region20: #{decoder_forward.1} parent=0 // pred_region
    _
  $region21: #{decoder_forward.1} parent=0 // pred_fallthru
    _
  // Predicated region
  $region22: #{decoder_forward.1} parent=0 // pred_check
    _
  $region23: #{decoder_forward.1} parent=0 // pred_check_branch
    %30 = sbr.rel (0) target = $region25
  $region24: #{decoder_forward.1} parent=0 // pred_region
    _
  $region25: #{decoder_forward.1} parent=0 // pred_fallthru
    _
  // Predicated region
  $region26: #{decoder_forward.1} parent=0 // pred_check
    _
  $region27: #{decoder_forward.1} parent=0 // pred_check_branch
    %32 = sbr.rel (0) target = $region29
  $region28: #{decoder_forward.1} parent=0 // pred_region
    _
  $region29: #{decoder_forward.1} parent=0 // pred_fallthru
    _
  // Predicated region
  $region30: #{decoder_forward.1} parent=0 // pred_check
    _
  $region31: #{decoder_forward.1} parent=0 // pred_check_branch
    %34 = sbr.rel (0) target = $region33
  $region32: #{decoder_forward.1} parent=0 // pred_region
    _
  $region33: #{decoder_forward.1} parent=0 // pred_fallthru
    _
  // Predicated region
  $region34: #{decoder_forward.1} parent=0 // pred_check
    _
  $region35: #{decoder_forward.1} parent=0 // pred_check_branch
    %36 = sbr.rel (0) target = $region37
  $region36: #{decoder_forward.1} parent=0 // pred_region
    _
  $region37: #{decoder_forward.1} parent=0 // pred_fallthru
    _
  // Predicated region
  $region38: #{decoder_forward.1} parent=0 // pred_check
    _
  $region39: #{decoder_forward.1} parent=0 // pred_check_branch
    %38 = sbr.rel (0) target = $region41
  $region40: #{decoder_forward.1} parent=0 // pred_region
    _
  $region41: #{decoder_forward.1} parent=0 // pred_fallthru
    _
  // Predicated region
  $region42: #{decoder_forward.1} parent=0 // pred_check
    _
  $region43: #{decoder_forward.1} parent=0 // pred_check_branch
    %40 = sbr.rel (0) target = $region45
  $region44: #{decoder_forward.1} parent=0 // pred_region
    _
  $region45: #{decoder_forward.1} parent=0 // pred_fallthru
    _
  // Predicated region
  $region46: #{decoder_forward.1} parent=0 // pred_check
    _
  $region47: #{decoder_forward.1} parent=0 // pred_check_branch
    %42 = sbr.rel (0) target = $region49
  $region48: #{decoder_forward.1} parent=0 // pred_region
    _
  $region49: #{decoder_forward.1} parent=0 // pred_fallthru
    _
  %v44 = vld [vmem:[%s0] sm:$0xf]
  %v45 = vld [vmem:[%s0 + $0x4] sm:$0xf]
  %v46 = vld [vmem:[%s0 + $0x8] sm:$0xf]
  %v47 = vld [vmem:[%s0 + $0xc] sm:$0xf]
  %v48 = vld [vmem:[%s0 + $0x10] sm:$0xf]
  %v49 = vld [vmem:[%s0 + $0x14] sm:$0xf]
  %v50 = vld [vmem:[%s2] sm:$0xff]
  %v51 = vld [vmem:[%s2 + $0x8] sm:$0xf]
  %v52 = vld [vmem:[%s2 + $0xc] sm:$0xff]
  %v53 = vld [vmem:[%s2 + $0x14] sm:$0xf]
  %v54 = vld [vmem:[%s4] sm:$0x7]
  %v56 = vlaneseq
  %v57 = vshrl.u32 %v56, 7
  %v58 = vsub.s32 0, %v57
  %v59 = vrot.slane %v54, %v58
  %v60 = vlaneseq
  %v61 = vshrl.u32 %v60, 7
  %v62 = vsub.s32 1, %v61
  %v63 = vrot.slane %v54, %v62
  %v64 = vlaneseq
  %v65 = vshrl.u32 %v64, 7
  %v66 = vsub.s32 2, %v65
  %v67 = vrot.slane %v54, %v66
  %v77 = vunpack.c.l.b16 %v44
  %v78 = vunpack.c.l.b16 %v45
  %v79 = vunpack.c.l.b16 %v46
  %v80 = vunpack.c.l.b16 %v47
  %v81 = vunpack.c.l.b16 %v48
  %v82 = vunpack.c.l.b16 %v49
  %v83 = vpack.c.b16 %v78, %v77
  %v84 = vpack.c.b16 %v80, %v79
  %v85 = vpack.c.b16 %v82, %v81
  %v90 = vunpack.c.l.b16 %v50
  %v91 = vunpack.c.h.b16 %v50
  %v92 = vunpack.c.l.b16 %v51
  %v93 = vunpack.c.l.b16 %v52
  %v94 = vunpack.c.h.b16 %v52
  %v95 = vunpack.c.l.b16 %v53
  %v96 = vpack.c.b16 %v93, %v90
  %v97 = vpack.c.b16 %v94, %v91
  %v98 = vpack.c.b16 %v95, %v92
  %vm102 = vcmask 130048
  %v104 = vsel %vm102, %v83, 0
  %v107 = vsel %vm102, %v84, 0
  %v110 = vsel %vm102, %v85, 0
  %112 = vmatprep.subr.bf16.mxu0 0
  %113 = vmatpush1.bf16.msra.mxu0 0
  %114 = vmatprep.subr.bf16.mxu0 0
  %115 = vmatpush1.bf16.msra.mxu0 0
  %116 = vmatprep.subr.bf16.mxu0 0
  %117 = vmatpush1.bf16.msra.mxu0 0
  %118 = vmatprep.subr.bf16.mxu0 0
  %119 = vmatpush1.bf16.msra.mxu0 0
  %120 = vmatprep.subr.bf16.mxu0 0
  %121 = vmatpush1.bf16.msra.mxu0 0
  %122 = vmatprep.subr.bf16.mxu0 0
  %123 = vmatpush1.bf16.msra.mxu0 0
  %124 = vmatprep.subr.bf16.mxu0 0
  %125 = vmatpush1.bf16.msra.mxu0 0
  %126 = vmatprep.subr.bf16.mxu0 %v97
  %127 = vmatpush1.bf16.msra.mxu0 %v96
  %128 = vmatprep.subr.bf16.mxu0 0
  %129 = vmatpush2.bf16.msra.mxu0 0
  %130 = vmatprep.subr.bf16.mxu0 0
  %131 = vmatpush2.bf16.msra.mxu0 0
  %132 = vmatprep.subr.bf16.mxu0 0
  %133 = vmatpush2.bf16.msra.mxu0 0
  %134 = vmatprep.subr.bf16.mxu0 0
  %135 = vmatpush2.bf16.msra.mxu0 0
  %136 = vmatprep.subr.bf16.mxu0 0
  %137 = vmatpush2.bf16.msra.mxu0 0
  %138 = vmatprep.subr.bf16.mxu0 0
  %139 = vmatpush2.bf16.msra.mxu0 0
  %140 = vmatprep.subr.bf16.mxu0 0
  %141 = vmatpush2.bf16.msra.mxu0 0
  %142 = vmatprep.subr.bf16.mxu0 0
  %143 = vmatpush2.bf16.msra.mxu0 0
  %144 = vmatprep.mubr.bf16.mxu0 0
  %145 = vmatmul.mubr.bf16.gmra.mxu0 %v104
  %v146 = vpop.f32.mrf.mxu0
  %v147 = vadd.f32 %v59, %v146
  %v148 = vpop.f32.mrf.mxu0
  %v149 = vadd.f32 %v63, %v148
  %v150 = vpop.f32.mrf.mxu0
  %v151 = vadd.f32 %v59, %v150
  %v152 = vpop.f32.mrf.mxu0
  %v153 = vadd.f32 %v63, %v152
  %154 = vmatprep.mubr.bf16.mxu0 0
  %155 = vmatmul.mubr.bf16.gmra.mxu0 %v107
  %v156 = vpop.f32.mrf.mxu0
  %v157 = vadd.f32 %v59, %v156
  %v158 = vpop.f32.mrf.mxu0
  %v159 = vadd.f32 %v63, %v158
  %v160 = vpop.f32.mrf.mxu0
  %v161 = vadd.f32 %v59, %v160
  %v162 = vpop.f32.mrf.mxu0
  %v163 = vadd.f32 %v63, %v162
  %164 = vmatprep.mubr.bf16.mxu0 0
  %165 = vmatmul.mubr.bf16.gmra.mxu0 %v110
  %v166 = vpop.f32.mrf.mxu0
  %v167 = vadd.f32 %v59, %v166
  %v168 = vpop.f32.mrf.mxu0
  %v169 = vadd.f32 %v63, %v168
  %v170 = vpop.f32.mrf.mxu0
  %v171 = vadd.f32 %v59, %v170
  %v172 = vpop.f32.mrf.mxu0
  %v173 = vadd.f32 %v63, %v172
  %174 = vdwg.mxu0
  %175 = vmatprep.subr.bf16.mxu0 0
  %176 = vmatpush1.bf16.msra.mxu0 0
  %177 = vmatprep.subr.bf16.mxu0 0
  %178 = vmatpush1.bf16.msra.mxu0 0
  %179 = vmatprep.subr.bf16.mxu0 0
  %180 = vmatpush1.bf16.msra.mxu0 0
  %181 = vmatprep.subr.bf16.mxu0 0
  %182 = vmatpush1.bf16.msra.mxu0 0
  %183 = vmatprep.subr.bf16.mxu0 0
  %184 = vmatpush1.bf16.msra.mxu0 0
  %185 = vmatprep.subr.bf16.mxu0 0
  %186 = vmatpush1.bf16.msra.mxu0 0
  %187 = vmatprep.subr.bf16.mxu0 0
  %188 = vmatpush1.bf16.msra.mxu0 0
  %189 = vmatprep.subr.bf16.mxu0 0
  %190 = vmatpush1.bf16.msra.mxu0 %v98
  %191 = vmatprep.subr.bf16.mxu0 0
  %192 = vmatpush2.bf16.msra.mxu0 0
  %193 = vmatprep.subr.bf16.mxu0 0
  %194 = vmatpush2.bf16.msra.mxu0 0
  %195 = vmatprep.subr.bf16.mxu0 0
  %196 = vmatpush2.bf16.msra.mxu0 0
  %197 = vmatprep.subr.bf16.mxu0 0
  %198 = vmatpush2.bf16.msra.mxu0 0
  %199 = vmatprep.subr.bf16.mxu0 0
  %200 = vmatpush2.bf16.msra.mxu0 0
  %201 = vmatprep.subr.bf16.mxu0 0
  %202 = vmatpush2.bf16.msra.mxu0 0
  %203 = vmatprep.subr.bf16.mxu0 0
  %204 = vmatpush2.bf16.msra.mxu0 0
  %205 = vmatprep.subr.bf16.mxu0 0
  %206 = vmatpush2.bf16.msra.mxu0 0
  %207 = vmatprep.mubr.bf16.mxu0 0
  %208 = vmatmul.mubr.bf16.gmra.mxu0 %v104
  %v209 = vpop.f32.mrf.mxu0
  %v210 = vadd.f32 %v67, %v209
  %v211 = vpop.f32.mrf.mxu0
  %v212 = vpop.f32.mrf.mxu0
  %v213 = vadd.f32 %v67, %v212
  %v214 = vpop.f32.mrf.mxu0
  %215 = vmatprep.mubr.bf16.mxu0 0
  %216 = vmatmul.mubr.bf16.gmra.mxu0 %v107
  %v217 = vpop.f32.mrf.mxu0
  %v218 = vadd.f32 %v67, %v217
  %v219 = vpop.f32.mrf.mxu0
  %v220 = vpop.f32.mrf.mxu0
  %v221 = vadd.f32 %v67, %v220
  %v222 = vpop.f32.mrf.mxu0
  %223 = vmatprep.mubr.bf16.mxu0 0
  %224 = vmatmul.mubr.bf16.gmra.mxu0 %v110
  %v225 = vpop.f32.mrf.mxu0
  %v226 = vadd.f32 %v67, %v225
  %v227 = vpop.f32.mrf.mxu0
  %v228 = vpop.f32.mrf.mxu0
  %v229 = vadd.f32 %v67, %v228
  %v230 = vpop.f32.mrf.mxu0
  %231 = vdwg.mxu0
  %v232 = vld [vmem:[%s3] sm:$0xff]
  %v233 = vld [vmem:[%s3 + $0x8] sm:$0xf]
  %v234 = vld [vmem:[%s3 + $0xc] sm:$0xff]
  %v235 = vld [vmem:[%s3 + $0x14] sm:$0xf]
  %v236 = vld [vmem:[%s3 + $0x18] sm:$0xff]
  %v237 = vld [vmem:[%s3 + $0x20] sm:$0xf]
  %v238 = vld [vmem:[%s3 + $0x24] sm:$0xff]
  %v239 = vld [vmem:[%s3 + $0x2c] sm:$0xf]
  %v240 = vld [vmem:[%s3 + $0x30] sm:$0xff]
  %v241 = vld [vmem:[%s3 + $0x38] sm:$0xf]
  %v242 = vld [vmem:[%s3 + $0x3c] sm:$0xff]
  %v243 = vld [vmem:[%s3 + $0x44] sm:$0xf]
  %v244 = vld [vmem:[%s3 + $0x48] sm:$0xff]
  %v245 = vld [vmem:[%s3 + $0x50] sm:$0xf]
  %v246 = vld [vmem:[%s3 + $0x54] sm:$0xff]
  %v247 = vld [vmem:[%s3 + $0x5c] sm:$0xf]
  %v248 = vld [vmem:[%s3 + $0x60] sm:$0xff]
  %v249 = vld [vmem:[%s3 + $0x68] sm:$0xf]
  %v250 = vld [vmem:[%s3 + $0x6c] sm:$0xff]
  %v251 = vld [vmem:[%s3 + $0x74] sm:$0xf]
  %v252 = vld [vmem:[%s3 + $0x78] sm:$0xff]
  %v253 = vld [vmem:[%s3 + $0x80] sm:$0xf]
  %v254 = vld [vmem:[%s3 + $0x84] sm:$0xff]
  %v255 = vld [vmem:[%s3 + $0x8c] sm:$0xf]
  %v256 = vld [vmem:[%s3 + $0x90] sm:$0xff]
  %v257 = vld [vmem:[%s3 + $0x98] sm:$0xf]
  %v258 = vld [vmem:[%s3 + $0x9c] sm:$0xff]
  %v259 = vld [vmem:[%s3 + $0xa4] sm:$0xf]
  %v260 = vld [vmem:[%s3 + $0xa8] sm:$0xff]
  %v261 = vld [vmem:[%s3 + $0xb0] sm:$0xf]
  %v262 = vld [vmem:[%s3 + $0xb4] sm:$0xff]
  %v263 = vld [vmem:[%s3 + $0xbc] sm:$0xf]
  %v264 = vld [vmem:[%s5] sm:$0x7]
  %v265 = vld [vmem:[%s1] sm:$0xff]
  %v266 = vpack.c.bf16 %v265, %v265
  %v268 = vlaneseq
  %v269 = vshrl.u32 %v268, 7
  %v270 = vsub.s32 0, %v269
  %v271 = vrot.slane %v264, %v270
  %v272 = vlaneseq
  %v273 = vshrl.u32 %v272, 7
  %v274 = vsub.s32 1, %v273
  %v275 = vrot.slane %v264, %v274
  %v276 = vlaneseq
  %v277 = vshrl.u32 %v276, 7
  %v278 = vsub.s32 2, %v277
  %v279 = vrot.slane %v264, %v278
  %v315 = vunpack.c.l.b16 %v232
  %v316 = vunpack.c.h.b16 %v232
  %v317 = vunpack.c.l.b16 %v233
  %v318 = vunpack.c.l.b16 %v234
  %v319 = vunpack.c.h.b16 %v234
  %v320 = vunpack.c.l.b16 %v235
  %v321 = vunpack.c.l.b16 %v236
  %v322 = vunpack.c.h.b16 %v236
  %v323 = vunpack.c.l.b16 %v237
  %v324 = vunpack.c.l.b16 %v238
  %v325 = vunpack.c.h.b16 %v238
  %v326 = vunpack.c.l.b16 %v239
  %v327 = vunpack.c.l.b16 %v240
  %v328 = vunpack.c.h.b16 %v240
  %v329 = vunpack.c.l.b16 %v241
  %v330 = vunpack.c.l.b16 %v242
  %v331 = vunpack.c.h.b16 %v242
  %v332 = vunpack.c.l.b16 %v243
  %v333 = vunpack.c.l.b16 %v244
  %v334 = vunpack.c.h.b16 %v244
  %v335 = vunpack.c.l.b16 %v245
  %v336 = vunpack.c.l.b16 %v246
  %v337 = vunpack.c.h.b16 %v246
  %v338 = vunpack.c.l.b16 %v247
  %v339 = vunpack.c.l.b16 %v248
  %v340 = vunpack.c.h.b16 %v248
  %v341 = vunpack.c.l.b16 %v249
  %v342 = vunpack.c.l.b16 %v250
  %v343 = vunpack.c.h.b16 %v250
  %v344 = vunpack.c.l.b16 %v251
  %v345 = vunpack.c.l.b16 %v252
  %v346 = vunpack.c.h.b16 %v252
  %v347 = vunpack.c.l.b16 %v253
  %v348 = vunpack.c.l.b16 %v254
  %v349 = vunpack.c.h.b16 %v254
  %v350 = vunpack.c.l.b16 %v255
  %v351 = vunpack.c.l.b16 %v256
  %v352 = vunpack.c.h.b16 %v256
  %v353 = vunpack.c.l.b16 %v257
  %v354 = vunpack.c.l.b16 %v258
  %v355 = vunpack.c.h.b16 %v258
  %v356 = vunpack.c.l.b16 %v259
  %v357 = vunpack.c.l.b16 %v260
  %v358 = vunpack.c.h.b16 %v260
  %v359 = vunpack.c.l.b16 %v261
  %v360 = vunpack.c.l.b16 %v262
  %v361 = vunpack.c.h.b16 %v262
  %v362 = vunpack.c.l.b16 %v263
  %v363 = vpack.c.b16 %v318, %v315
  %v364 = vpack.c.b16 %v319, %v316
  %v365 = vpack.c.b16 %v320, %v317
  %v366 = vpack.c.b16 %v324, %v321
  %v367 = vpack.c.b16 %v325, %v322
  %v368 = vpack.c.b16 %v326, %v323
  %v369 = vpack.c.b16 %v330, %v327
  %v370 = vpack.c.b16 %v331, %v328
  %v371 = vpack.c.b16 %v332, %v329
  %v372 = vpack.c.b16 %v336, %v333
  %v373 = vpack.c.b16 %v337, %v334
  %v374 = vpack.c.b16 %v338, %v335
  %v375 = vpack.c.b16 %v342, %v339
  %v376 = vpack.c.b16 %v343, %v340
  %v377 = vpack.c.b16 %v344, %v341
  %v378 = vpack.c.b16 %v348, %v345
  %v379 = vpack.c.b16 %v349, %v346
  %v380 = vpack.c.b16 %v350, %v347
  %v381 = vpack.c.b16 %v354, %v351
  %v382 = vpack.c.b16 %v355, %v352
  %v383 = vpack.c.b16 %v356, %v353
  %v384 = vpack.c.b16 %v360, %v357
  %v385 = vpack.c.b16 %v361, %v358
  %v386 = vpack.c.b16 %v362, %v359
  %411 = vmatprep.subr.bf16.mxu0 %v385
  %412 = vmatpush1.bf16.msra.mxu0 %v384
  %413 = vmatprep.subr.bf16.mxu0 %v382
  %414 = vmatpush1.bf16.msra.mxu0 %v381
  %415 = vmatprep.subr.bf16.mxu0 %v379
  %416 = vmatpush1.bf16.msra.mxu0 %v378
  %417 = vmatprep.subr.bf16.mxu0 %v376
  %418 = vmatpush1.bf16.msra.mxu0 %v375
  %419 = vmatprep.subr.bf16.mxu0 %v373
  %420 = vmatpush1.bf16.msra.mxu0 %v372
  %421 = vmatprep.subr.bf16.mxu0 %v370
  %422 = vmatpush1.bf16.msra.mxu0 %v369
  %423 = vmatprep.subr.bf16.mxu0 %v367
  %424 = vmatpush1.bf16.msra.mxu0 %v366
  %425 = vmatprep.subr.bf16.mxu0 %v364
  %426 = vmatpush1.bf16.msra.mxu0 %v363
  %427 = vmatprep.subr.bf16.mxu0 0
  %428 = vmatpush2.bf16.msra.mxu0 0
  %429 = vmatprep.subr.bf16.mxu0 0
  %430 = vmatpush2.bf16.msra.mxu0 0
  %431 = vmatprep.subr.bf16.mxu0 0
  %432 = vmatpush2.bf16.msra.mxu0 0
  %433 = vmatprep.subr.bf16.mxu0 0
  %434 = vmatpush2.bf16.msra.mxu0 0
  %435 = vmatprep.subr.bf16.mxu0 0
  %436 = vmatpush2.bf16.msra.mxu0 0
  %437 = vmatprep.subr.bf16.mxu0 0
  %438 = vmatpush2.bf16.msra.mxu0 0
  %439 = vmatprep.subr.bf16.mxu0 0
  %440 = vmatpush2.bf16.msra.mxu0 0
  %441 = vmatprep.subr.bf16.mxu0 0
  %442 = vmatpush2.bf16.msra.mxu0 0
  %443 = vmatprep.mubr.bf16.mxu0 0
  %444 = vmatmul.mubr.bf16.gmra.mxu0 %v266
  %v445 = vpop.f32.mrf.mxu0
  %v446 = vadd.f32 %v271, %v445
  %v447 = vpop.f32.mrf.mxu0
  %v448 = vadd.f32 %v275, %v447
  %v449 = vpop.f32.mrf.mxu0
  %v450 = vpop.f32.mrf.mxu0
  %451 = vdwg.mxu0
  %452 = vmatprep.subr.bf16.mxu0 0
  %453 = vmatpush1.bf16.msra.mxu0 %v386
  %454 = vmatprep.subr.bf16.mxu0 0
  %455 = vmatpush1.bf16.msra.mxu0 %v383
  %456 = vmatprep.subr.bf16.mxu0 0
  %457 = vmatpush1.bf16.msra.mxu0 %v380
  %458 = vmatprep.subr.bf16.mxu0 0
  %459 = vmatpush1.bf16.msra.mxu0 %v377
  %460 = vmatprep.subr.bf16.mxu0 0
  %461 = vmatpush1.bf16.msra.mxu0 %v374
  %462 = vmatprep.subr.bf16.mxu0 0
  %463 = vmatpush1.bf16.msra.mxu0 %v371
  %464 = vmatprep.subr.bf16.mxu0 0
  %465 = vmatpush1.bf16.msra.mxu0 %v368
  %466 = vmatprep.subr.bf16.mxu0 0
  %467 = vmatpush1.bf16.msra.mxu0 %v365
  %468 = vmatprep.subr.bf16.mxu0 0
  %469 = vmatpush2.bf16.msra.mxu0 0
  %470 = vmatprep.subr.bf16.mxu0 0
  %471 = vmatpush2.bf16.msra.mxu0 0
  %472 = vmatprep.subr.bf16.mxu0 0
  %473 = vmatpush2.bf16.msra.mxu0 0
  %474 = vmatprep.subr.bf16.mxu0 0
  %475 = vmatpush2.bf16.msra.mxu0 0
  %476 = vmatprep.subr.bf16.mxu0 0
  %477 = vmatpush2.bf16.msra.mxu0 0
  %478 = vmatprep.subr.bf16.mxu0 0
  %479 = vmatpush2.bf16.msra.mxu0 0
  %480 = vmatprep.subr.bf16.mxu0 0
  %481 = vmatpush2.bf16.msra.mxu0 0
  %482 = vmatprep.subr.bf16.mxu0 0
  %483 = vmatpush2.bf16.msra.mxu0 0
  %484 = vmatprep.mubr.bf16.mxu0 0
  %485 = vmatmul.mubr.bf16.gmra.mxu0 %v266
  %v486 = vpop.f32.mrf.mxu0
  %v487 = vadd.f32 %v279, %v486
  %v488 = vpop.f32.mrf.mxu0
  %v489 = vpop.f32.mrf.mxu0
  %v490 = vpop.f32.mrf.mxu0
  %491 = vdwg.mxu0
  %v492 = vadd.f32 %v147, %v446
  %v493 = vadd.f32 %v149, %v448
  %v494 = vxor.u32 %v492, 2147483648
  %v495 = vxor.u32 %v493, 2147483648
  %v496 = vmul.f32 %v494, 1.442695
  %v497 = vpow.pop %v496
  %v498 = vmul.f32 %v495, 1.442695
  %v499 = vpow.pop %v498
  %v500 = vadd.f32 %v497, 1.0
  %v501 = vadd.f32 %v499, 1.0
  %v502 = vrcp.pop %v500
  %v503 = vmul.f32 1.0, %v502
  %v504 = vrcp.pop %v501
  %v505 = vmul.f32 1.0, %v504
  %v506 = vmul.f32 %v503, %v487
  %v507 = vadd.f32 %v210, %v506
  %v508 = vtanh.pop %v507
  %v509 = vsub.f32 1.0, %v505
  %v510 = vmul.f32 %v509, %v508
  %v511 = vmul.f32 %v505, %v265
  %v512 = vadd.f32 %v510, %v511
  %513 = vst [vmem:[#allocation2] sm:$0xff] %v512
  %v514 = vpack.c.bf16 %v512, %v512
  %515 = vmatprep.subr.bf16.mxu0 %v385
  %516 = vmatpush1.bf16.msra.mxu0 %v384
  %517 = vmatprep.subr.bf16.mxu0 %v382
  %518 = vmatpush1.bf16.msra.mxu0 %v381
  %519 = vmatprep.subr.bf16.mxu0 %v379
  %520 = vmatpush1.bf16.msra.mxu0 %v378
  %521 = vmatprep.subr.bf16.mxu0 %v376
  %522 = vmatpush1.bf16.msra.mxu0 %v375
  %523 = vmatprep.subr.bf16.mxu0 %v373
  %524 = vmatpush1.bf16.msra.mxu0 %v372
  %525 = vmatprep.subr.bf16.mxu0 %v370
  %526 = vmatpush1.bf16.msra.mxu0 %v369
  %527 = vmatprep.subr.bf16.mxu0 %v367
  %528 = vmatpush1.bf16.msra.mxu0 %v366
  %529 = vmatprep.subr.bf16.mxu0 %v364
  %530 = vmatpush1.bf16.msra.mxu0 %v363
  %531 = vmatprep.subr.bf16.mxu0 0
  %532 = vmatpush2.bf16.msra.mxu0 0
  %533 = vmatprep.subr.bf16.mxu0 0
  %534 = vmatpush2.bf16.msra.mxu0 0
  %535 = vmatprep.subr.bf16.mxu0 0
  %536 = vmatpush2.bf16.msra.mxu0 0
  %537 = vmatprep.subr.bf16.mxu0 0
  %538 = vmatpush2.bf16.msra.mxu0 0
  %539 = vmatprep.subr.bf16.mxu0 0
  %540 = vmatpush2.bf16.msra.mxu0 0
  %541 = vmatprep.subr.bf16.mxu0 0
  %542 = vmatpush2.bf16.msra.mxu0 0
  %543 = vmatprep.subr.bf16.mxu0 0
  %544 = vmatpush2.bf16.msra.mxu0 0
  %545 = vmatprep.subr.bf16.mxu0 0
  %546 = vmatpush2.bf16.msra.mxu0 0
  %547 = vmatprep.mubr.bf16.mxu0 0
  %548 = vmatmul.mubr.bf16.gmra.mxu0 %v514
  %v549 = vpop.f32.mrf.mxu0
  %v550 = vadd.f32 %v271, %v549
  %v551 = vpop.f32.mrf.mxu0
  %v552 = vadd.f32 %v275, %v551
  %v553 = vpop.f32.mrf.mxu0
  %v554 = vpop.f32.mrf.mxu0
  %555 = vdwg.mxu0
  %556 = vmatprep.subr.bf16.mxu0 0
  %557 = vmatpush1.bf16.msra.mxu0 %v386
  %558 = vmatprep.subr.bf16.mxu0 0
  %559 = vmatpush1.bf16.msra.mxu0 %v383
  %560 = vmatprep.subr.bf16.mxu0 0
  %561 = vmatpush1.bf16.msra.mxu0 %v380
  %562 = vmatprep.subr.bf16.mxu0 0
  %563 = vmatpush1.bf16.msra.mxu0 %v377
  %564 = vmatprep.subr.bf16.mxu0 0
  %565 = vmatpush1.bf16.msra.mxu0 %v374
  %566 = vmatprep.subr.bf16.mxu0 0
  %567 = vmatpush1.bf16.msra.mxu0 %v371
  %568 = vmatprep.subr.bf16.mxu0 0
  %569 = vmatpush1.bf16.msra.mxu0 %v368
  %570 = vmatprep.subr.bf16.mxu0 0
  %571 = vmatpush1.bf16.msra.mxu0 %v365
  %572 = vmatprep.subr.bf16.mxu0 0
  %573 = vmatpush2.bf16.msra.mxu0 0
  %574 = vmatprep.subr.bf16.mxu0 0
  %575 = vmatpush2.bf16.msra.mxu0 0
  %576 = vmatprep.subr.bf16.mxu0 0
  %577 = vmatpush2.bf16.msra.mxu0 0
  %578 = vmatprep.subr.bf16.mxu0 0
  %579 = vmatpush2.bf16.msra.mxu0 0
  %580 = vmatprep.subr.bf16.mxu0 0
  %581 = vmatpush2.bf16.msra.mxu0 0
  %582 = vmatprep.subr.bf16.mxu0 0
  %583 = vmatpush2.bf16.msra.mxu0 0
  %584 = vmatprep.subr.bf16.mxu0 0
  %585 = vmatpush2.bf16.msra.mxu0 0
  %586 = vmatprep.subr.bf16.mxu0 0
  %587 = vmatpush2.bf16.msra.mxu0 0
  %588 = vmatprep.mubr.bf16.mxu0 0
  %589 = vmatmul.mubr.bf16.gmra.mxu0 %v514
  %v590 = vpop.f32.mrf.mxu0
  %v591 = vadd.f32 %v279, %v590
  %v592 = vpop.f32.mrf.mxu0
  %v593 = vpop.f32.mrf.mxu0
  %v594 = vpop.f32.mrf.mxu0
  %595 = vdwg.mxu0
  %v596 = vadd.f32 %v151, %v550
  %v597 = vadd.f32 %v153, %v552
  %v598 = vxor.u32 %v596, 2147483648
  %v599 = vxor.u32 %v597, 2147483648
  %v600 = vmul.f32 %v598, 1.442695
  %v601 = vpow.pop %v600
  %v602 = vmul.f32 %v599, 1.442695
  %v603 = vpow.pop %v602
  %v604 = vadd.f32 %v601, 1.0
  %v605 = vadd.f32 %v603, 1.0
  %v606 = vrcp.pop %v604
  %v607 = vmul.f32 1.0, %v606
  %v608 = vrcp.pop %v605
  %v609 = vmul.f32 1.0, %v608
  %v610 = vmul.f32 %v607, %v591
  %v611 = vadd.f32 %v213, %v610
  %v612 = vtanh.pop %v611
  %v613 = vsub.f32 1.0, %v609
  %v614 = vmul.f32 %v613, %v612
  %v615 = vmul.f32 %v609, %v512
  %v616 = vadd.f32 %v614, %v615
  %s617 = scalar_lea.vmem [#allocation2], 8
  %618 = vst [vmem:[%s617] sm:$0xff] %v616
  %v619 = vpack.c.bf16 %v616, %v616
  %620 = vmatprep.subr.bf16.mxu0 %v385
  %621 = vmatpush1.bf16.msra.mxu0 %v384
  %622 = vmatprep.subr.bf16.mxu0 %v382
  %623 = vmatpush1.bf16.msra.mxu0 %v381
  %624 = vmatprep.subr.bf16.mxu0 %v379
  %625 = vmatpush1.bf16.msra.mxu0 %v378
  %626 = vmatprep.subr.bf16.mxu0 %v376
  %627 = vmatpush1.bf16.msra.mxu0 %v375
  %628 = vmatprep.subr.bf16.mxu0 %v373
  %629 = vmatpush1.bf16.msra.mxu0 %v372
  %630 = vmatprep.subr.bf16.mxu0 %v370
  %631 = vmatpush1.bf16.msra.mxu0 %v369
  %632 = vmatprep.subr.bf16.mxu0 %v367
  %633 = vmatpush1.bf16.msra.mxu0 %v366
  %634 = vmatprep.subr.bf16.mxu0 %v364
  %635 = vmatpush1.bf16.msra.mxu0 %v363
  %636 = vmatprep.subr.bf16.mxu0 0
  %637 = vmatpush2.bf16.msra.mxu0 0
  %638 = vmatprep.subr.bf16.mxu0 0
  %639 = vmatpush2.bf16.msra.mxu0 0
  %640 = vmatprep.subr.bf16.mxu0 0
  %641 = vmatpush2.bf16.msra.mxu0 0
  %642 = vmatprep.subr.bf16.mxu0 0
  %643 = vmatpush2.bf16.msra.mxu0 0
  %644 = vmatprep.subr.bf16.mxu0 0
  %645 = vmatpush2.bf16.msra.mxu0 0
  %646 = vmatprep.subr.bf16.mxu0 0
  %647 = vmatpush2.bf16.msra.mxu0 0
  %648 = vmatprep.subr.bf16.mxu0 0
  %649 = vmatpush2.bf16.msra.mxu0 0
  %650 = vmatprep.subr.bf16.mxu0 0
  %651 = vmatpush2.bf16.msra.mxu0 0
  %652 = vmatprep.mubr.bf16.mxu0 0
  %653 = vmatmul.mubr.bf16.gmra.mxu0 %v619
  %v654 = vpop.f32.mrf.mxu0
  %v655 = vadd.f32 %v271, %v654
  %v656 = vpop.f32.mrf.mxu0
  %v657 = vadd.f32 %v275, %v656
  %v658 = vpop.f32.mrf.mxu0
  %v659 = vpop.f32.mrf.mxu0
  %660 = vdwg.mxu0
  %661 = vmatprep.subr.bf16.mxu0 0
  %662 = vmatpush1.bf16.msra.mxu0 %v386
  %663 = vmatprep.subr.bf16.mxu0 0
  %664 = vmatpush1.bf16.msra.mxu0 %v383
  %665 = vmatprep.subr.bf16.mxu0 0
  %666 = vmatpush1.bf16.msra.mxu0 %v380
  %667 = vmatprep.subr.bf16.mxu0 0
  %668 = vmatpush1.bf16.msra.mxu0 %v377
  %669 = vmatprep.subr.bf16.mxu0 0
  %670 = vmatpush1.bf16.msra.mxu0 %v374
  %671 = vmatprep.subr.bf16.mxu0 0
  %672 = vmatpush1.bf16.msra.mxu0 %v371
  %673 = vmatprep.subr.bf16.mxu0 0
  %674 = vmatpush1.bf16.msra.mxu0 %v368
  %675 = vmatprep.subr.bf16.mxu0 0
  %676 = vmatpush1.bf16.msra.mxu0 %v365
  %677 = vmatprep.subr.bf16.mxu0 0
  %678 = vmatpush2.bf16.msra.mxu0 0
  %679 = vmatprep.subr.bf16.mxu0 0
  %680 = vmatpush2.bf16.msra.mxu0 0
  %681 = vmatprep.subr.bf16.mxu0 0
  %682 = vmatpush2.bf16.msra.mxu0 0
  %683 = vmatprep.subr.bf16.mxu0 0
  %684 = vmatpush2.bf16.msra.mxu0 0
  %685 = vmatprep.subr.bf16.mxu0 0
  %686 = vmatpush2.bf16.msra.mxu0 0
  %687 = vmatprep.subr.bf16.mxu0 0
  %688 = vmatpush2.bf16.msra.mxu0 0
  %689 = vmatprep.subr.bf16.mxu0 0
  %690 = vmatpush2.bf16.msra.mxu0 0
  %691 = vmatprep.subr.bf16.mxu0 0
  %692 = vmatpush2.bf16.msra.mxu0 0
  %693 = vmatprep.mubr.bf16.mxu0 0
  %694 = vmatmul.mubr.bf16.gmra.mxu0 %v619
  %v695 = vpop.f32.mrf.mxu0
  %v696 = vadd.f32 %v279, %v695
  %v697 = vpop.f32.mrf.mxu0
  %v698 = vpop.f32.mrf.mxu0
  %v699 = vpop.f32.mrf.mxu0
  %700 = vdwg.mxu0
  %v701 = vadd.f32 %v157, %v655
  %v702 = vadd.f32 %v159, %v657
  %v703 = vxor.u32 %v701, 2147483648
  %v704 = vxor.u32 %v702, 2147483648
  %v705 = vmul.f32 %v703, 1.442695
  %v706 = vpow.pop %v705
  %v707 = vmul.f32 %v704, 1.442695
  %v708 = vpow.pop %v707
  %v709 = vadd.f32 %v706, 1.0
  %v710 = vadd.f32 %v708, 1.0
  %v711 = vrcp.pop %v709
  %v712 = vmul.f32 1.0, %v711
  %v713 = vrcp.pop %v710
  %v714 = vmul.f32 1.0, %v713
  %v715 = vmul.f32 %v712, %v696
  %v716 = vadd.f32 %v218, %v715
  %v717 = vtanh.pop %v716
  %v718 = vsub.f32 1.0, %v714
  %v719 = vmul.f32 %v718, %v717
  %v720 = vmul.f32 %v714, %v616
  %v721 = vadd.f32 %v719, %v720
  %s722 = scalar_lea.vmem [#allocation2], 16
  %723 = vst [vmem:[%s722] sm:$0xff] %v721
  %v724 = vpack.c.bf16 %v721, %v721
  %725 = vmatprep.subr.bf16.mxu0 %v385
  %726 = vmatpush1.bf16.msra.mxu0 %v384
  %727 = vmatprep.subr.bf16.mxu0 %v382
  %728 = vmatpush1.bf16.msra.mxu0 %v381
  %729 = vmatprep.subr.bf16.mxu0 %v379
  %730 = vmatpush1.bf16.msra.mxu0 %v378
  %731 = vmatprep.subr.bf16.mxu0 %v376
  %732 = vmatpush1.bf16.msra.mxu0 %v375
  %733 = vmatprep.subr.bf16.mxu0 %v373
  %734 = vmatpush1.bf16.msra.mxu0 %v372
  %735 = vmatprep.subr.bf16.mxu0 %v370
  %736 = vmatpush1.bf16.msra.mxu0 %v369
  %737 = vmatprep.subr.bf16.mxu0 %v367
  %738 = vmatpush1.bf16.msra.mxu0 %v366
  %739 = vmatprep.subr.bf16.mxu0 %v364
  %740 = vmatpush1.bf16.msra.mxu0 %v363
  %741 = vmatprep.subr.bf16.mxu0 0
  %742 = vmatpush2.bf16.msra.mxu0 0
  %743 = vmatprep.subr.bf16.mxu0 0
  %744 = vmatpush2.bf16.msra.mxu0 0
  %745 = vmatprep.subr.bf16.mxu0 0
  %746 = vmatpush2.bf16.msra.mxu0 0
  %747 = vmatprep.subr.bf16.mxu0 0
  %748 = vmatpush2.bf16.msra.mxu0 0
  %749 = vmatprep.subr.bf16.mxu0 0
  %750 = vmatpush2.bf16.msra.mxu0 0
  %751 = vmatprep.subr.bf16.mxu0 0
  %752 = vmatpush2.bf16.msra.mxu0 0
  %753 = vmatprep.subr.bf16.mxu0 0
  %754 = vmatpush2.bf16.msra.mxu0 0
  %755 = vmatprep.subr.bf16.mxu0 0
  %756 = vmatpush2.bf16.msra.mxu0 0
  %757 = vmatprep.mubr.bf16.mxu0 0
  %758 = vmatmul.mubr.bf16.gmra.mxu0 %v724
  %v759 = vpop.f32.mrf.mxu0
  %v760 = vadd.f32 %v271, %v759
  %v761 = vpop.f32.mrf.mxu0
  %v762 = vadd.f32 %v275, %v761
  %v763 = vpop.f32.mrf.mxu0
  %v764 = vpop.f32.mrf.mxu0
  %765 = vdwg.mxu0
  %766 = vmatprep.subr.bf16.mxu0 0
  %767 = vmatpush1.bf16.msra.mxu0 %v386
  %768 = vmatprep.subr.bf16.mxu0 0
  %769 = vmatpush1.bf16.msra.mxu0 %v383
  %770 = vmatprep.subr.bf16.mxu0 0
  %771 = vmatpush1.bf16.msra.mxu0 %v380
  %772 = vmatprep.subr.bf16.mxu0 0
  %773 = vmatpush1.bf16.msra.mxu0 %v377
  %774 = vmatprep.subr.bf16.mxu0 0
  %775 = vmatpush1.bf16.msra.mxu0 %v374
  %776 = vmatprep.subr.bf16.mxu0 0
  %777 = vmatpush1.bf16.msra.mxu0 %v371
  %778 = vmatprep.subr.bf16.mxu0 0
  %779 = vmatpush1.bf16.msra.mxu0 %v368
  %780 = vmatprep.subr.bf16.mxu0 0
  %781 = vmatpush1.bf16.msra.mxu0 %v365
  %782 = vmatprep.subr.bf16.mxu0 0
  %783 = vmatpush2.bf16.msra.mxu0 0
  %784 = vmatprep.subr.bf16.mxu0 0
  %785 = vmatpush2.bf16.msra.mxu0 0
  %786 = vmatprep.subr.bf16.mxu0 0
  %787 = vmatpush2.bf16.msra.mxu0 0
  %788 = vmatprep.subr.bf16.mxu0 0
  %789 = vmatpush2.bf16.msra.mxu0 0
  %790 = vmatprep.subr.bf16.mxu0 0
  %791 = vmatpush2.bf16.msra.mxu0 0
  %792 = vmatprep.subr.bf16.mxu0 0
  %793 = vmatpush2.bf16.msra.mxu0 0
  %794 = vmatprep.subr.bf16.mxu0 0
  %795 = vmatpush2.bf16.msra.mxu0 0
  %796 = vmatprep.subr.bf16.mxu0 0
  %797 = vmatpush2.bf16.msra.mxu0 0
  %798 = vmatprep.mubr.bf16.mxu0 0
  %799 = vmatmul.mubr.bf16.gmra.mxu0 %v724
  %v800 = vpop.f32.mrf.mxu0
  %v801 = vadd.f32 %v279, %v800
  %v802 = vpop.f32.mrf.mxu0
  %v803 = vpop.f32.mrf.mxu0
  %v804 = vpop.f32.mrf.mxu0
  %805 = vdwg.mxu0
  %v806 = vadd.f32 %v161, %v760
  %v807 = vadd.f32 %v163, %v762
  %v808 = vxor.u32 %v806, 2147483648
  %v809 = vxor.u32 %v807, 2147483648
  %v810 = vmul.f32 %v808, 1.442695
  %v811 = vpow.pop %v810
  %v812 = vmul.f32 %v809, 1.442695
  %v813 = vpow.pop %v812
  %v814 = vadd.f32 %v811, 1.0
  %v815 = vadd.f32 %v813, 1.0
  %v816 = vrcp.pop %v814
  %v817 = vmul.f32 1.0, %v816
  %v818 = vrcp.pop %v815
  %v819 = vmul.f32 1.0, %v818
  %v820 = vmul.f32 %v817, %v801
  %v821 = vadd.f32 %v221, %v820
  %v822 = vtanh.pop %v821
  %v823 = vsub.f32 1.0, %v819
  %v824 = vmul.f32 %v823, %v822
  %v825 = vmul.f32 %v819, %v721
  %v826 = vadd.f32 %v824, %v825
  %s827 = scalar_lea.vmem [#allocation2], 24
  %828 = vst [vmem:[%s827] sm:$0xff] %v826
  %v829 = vpack.c.bf16 %v826, %v826
  %830 = vmatprep.subr.bf16.mxu0 %v385
  %831 = vmatpush1.bf16.msra.mxu0 %v384
  %832 = vmatprep.subr.bf16.mxu0 %v382
  %833 = vmatpush1.bf16.msra.mxu0 %v381
  %834 = vmatprep.subr.bf16.mxu0 %v379
  %835 = vmatpush1.bf16.msra.mxu0 %v378
  %836 = vmatprep.subr.bf16.mxu0 %v376
  %837 = vmatpush1.bf16.msra.mxu0 %v375
  %838 = vmatprep.subr.bf16.mxu0 %v373
  %839 = vmatpush1.bf16.msra.mxu0 %v372
  %840 = vmatprep.subr.bf16.mxu0 %v370
  %841 = vmatpush1.bf16.msra.mxu0 %v369
  %842 = vmatprep.subr.bf16.mxu0 %v367
  %843 = vmatpush1.bf16.msra.mxu0 %v366
  %844 = vmatprep.subr.bf16.mxu0 %v364
  %845 = vmatpush1.bf16.msra.mxu0 %v363
  %846 = vmatprep.subr.bf16.mxu0 0
  %847 = vmatpush2.bf16.msra.mxu0 0
  %848 = vmatprep.subr.bf16.mxu0 0
  %849 = vmatpush2.bf16.msra.mxu0 0
  %850 = vmatprep.subr.bf16.mxu0 0
  %851 = vmatpush2.bf16.msra.mxu0 0
  %852 = vmatprep.subr.bf16.mxu0 0
  %853 = vmatpush2.bf16.msra.mxu0 0
  %854 = vmatprep.subr.bf16.mxu0 0
  %855 = vmatpush2.bf16.msra.mxu0 0
  %856 = vmatprep.subr.bf16.mxu0 0
  %857 = vmatpush2.bf16.msra.mxu0 0
  %858 = vmatprep.subr.bf16.mxu0 0
  %859 = vmatpush2.bf16.msra.mxu0 0
  %860 = vmatprep.subr.bf16.mxu0 0
  %861 = vmatpush2.bf16.msra.mxu0 0
  %862 = vmatprep.mubr.bf16.mxu0 0
  %863 = vmatmul.mubr.bf16.gmra.mxu0 %v829
  %v864 = vpop.f32.mrf.mxu0
  %v865 = vadd.f32 %v271, %v864
  %v866 = vpop.f32.mrf.mxu0
  %v867 = vadd.f32 %v275, %v866
  %v868 = vpop.f32.mrf.mxu0
  %v869 = vpop.f32.mrf.mxu0
  %870 = vdwg.mxu0
  %871 = vmatprep.subr.bf16.mxu0 0
  %872 = vmatpush1.bf16.msra.mxu0 %v386
  %873 = vmatprep.subr.bf16.mxu0 0
  %874 = vmatpush1.bf16.msra.mxu0 %v383
  %875 = vmatprep.subr.bf16.mxu0 0
  %876 = vmatpush1.bf16.msra.mxu0 %v380
  %877 = vmatprep.subr.bf16.mxu0 0
  %878 = vmatpush1.bf16.msra.mxu0 %v377
  %879 = vmatprep.subr.bf16.mxu0 0
  %880 = vmatpush1.bf16.msra.mxu0 %v374
  %881 = vmatprep.subr.bf16.mxu0 0
  %882 = vmatpush1.bf16.msra.mxu0 %v371
  %883 = vmatprep.subr.bf16.mxu0 0
  %884 = vmatpush1.bf16.msra.mxu0 %v368
  %885 = vmatprep.subr.bf16.mxu0 0
  %886 = vmatpush1.bf16.msra.mxu0 %v365
  %887 = vmatprep.subr.bf16.mxu0 0
  %888 = vmatpush2.bf16.msra.mxu0 0
  %889 = vmatprep.subr.bf16.mxu0 0
  %890 = vmatpush2.bf16.msra.mxu0 0
  %891 = vmatprep.subr.bf16.mxu0 0
  %892 = vmatpush2.bf16.msra.mxu0 0
  %893 = vmatprep.subr.bf16.mxu0 0
  %894 = vmatpush2.bf16.msra.mxu0 0
  %895 = vmatprep.subr.bf16.mxu0 0
  %896 = vmatpush2.bf16.msra.mxu0 0
  %897 = vmatprep.subr.bf16.mxu0 0
  %898 = vmatpush2.bf16.msra.mxu0 0
  %899 = vmatprep.subr.bf16.mxu0 0
  %900 = vmatpush2.bf16.msra.mxu0 0
  %901 = vmatprep.subr.bf16.mxu0 0
  %902 = vmatpush2.bf16.msra.mxu0 0
  %903 = vmatprep.mubr.bf16.mxu0 0
  %904 = vmatmul.mubr.bf16.gmra.mxu0 %v829
  %v905 = vpop.f32.mrf.mxu0
  %v906 = vadd.f32 %v279, %v905
  %v907 = vpop.f32.mrf.mxu0
  %v908 = vpop.f32.mrf.mxu0
  %v909 = vpop.f32.mrf.mxu0
  %910 = vdwg.mxu0
  %v911 = vadd.f32 %v167, %v865
  %v912 = vadd.f32 %v169, %v867
  %v913 = vxor.u32 %v911, 2147483648
  %v914 = vxor.u32 %v912, 2147483648
  %v915 = vmul.f32 %v913, 1.442695
  %v916 = vpow.pop %v915
  %v917 = vmul.f32 %v914, 1.442695
  %v918 = vpow.pop %v917
  %v919 = vadd.f32 %v916, 1.0
  %v920 = vadd.f32 %v918, 1.0
  %v921 = vrcp.pop %v919
  %v922 = vmul.f32 1.0, %v921
  %v923 = vrcp.pop %v920
  %v924 = vmul.f32 1.0, %v923
  %v925 = vmul.f32 %v922, %v906
  %v926 = vadd.f32 %v226, %v925
  %v927 = vtanh.pop %v926
  %v928 = vsub.f32 1.0, %v924
  %v929 = vmul.f32 %v928, %v927
  %v930 = vmul.f32 %v924, %v826
  %v931 = vadd.f32 %v929, %v930
  %s932 = scalar_lea.vmem [#allocation2], 32
  %933 = vst [vmem:[%s932] sm:$0xff] %v931
  %v934 = vpack.c.bf16 %v931, %v931
  %935 = vmatprep.subr.bf16.mxu0 %v385
  %936 = vmatpush1.bf16.msra.mxu0 %v384
  %937 = vmatprep.subr.bf16.mxu0 %v382
  %938 = vmatpush1.bf16.msra.mxu0 %v381
  %939 = vmatprep.subr.bf16.mxu0 %v379
  %940 = vmatpush1.bf16.msra.mxu0 %v378
  %941 = vmatprep.subr.bf16.mxu0 %v376
  %942 = vmatpush1.bf16.msra.mxu0 %v375
  %943 = vmatprep.subr.bf16.mxu0 %v373
  %944 = vmatpush1.bf16.msra.mxu0 %v372
  %945 = vmatprep.subr.bf16.mxu0 %v370
  %946 = vmatpush1.bf16.msra.mxu0 %v369
  %947 = vmatprep.subr.bf16.mxu0 %v367
  %948 = vmatpush1.bf16.msra.mxu0 %v366
  %949 = vmatprep.subr.bf16.mxu0 %v364
  %950 = vmatpush1.bf16.msra.mxu0 %v363
  %951 = vmatprep.subr.bf16.mxu0 0
  %952 = vmatpush2.bf16.msra.mxu0 0
  %953 = vmatprep.subr.bf16.mxu0 0
  %954 = vmatpush2.bf16.msra.mxu0 0
  %955 = vmatprep.subr.bf16.mxu0 0
  %956 = vmatpush2.bf16.msra.mxu0 0
  %957 = vmatprep.subr.bf16.mxu0 0
  %958 = vmatpush2.bf16.msra.mxu0 0
  %959 = vmatprep.subr.bf16.mxu0 0
  %960 = vmatpush2.bf16.msra.mxu0 0
  %961 = vmatprep.subr.bf16.mxu0 0
  %962 = vmatpush2.bf16.msra.mxu0 0
  %963 = vmatprep.subr.bf16.mxu0 0
  %964 = vmatpush2.bf16.msra.mxu0 0
  %965 = vmatprep.subr.bf16.mxu0 0
  %966 = vmatpush2.bf16.msra.mxu0 0
  %967 = vmatprep.mubr.bf16.mxu0 0
  %968 = vmatmul.mubr.bf16.gmra.mxu0 %v934
  %v969 = vpop.f32.mrf.mxu0
  %v970 = vadd.f32 %v271, %v969
  %v971 = vpop.f32.mrf.mxu0
  %v972 = vadd.f32 %v275, %v971
  %v973 = vpop.f32.mrf.mxu0
  %v974 = vpop.f32.mrf.mxu0
  %975 = vdwg.mxu0
  %976 = vmatprep.subr.bf16.mxu0 0
  %977 = vmatpush1.bf16.msra.mxu0 %v386
  %978 = vmatprep.subr.bf16.mxu0 0
  %979 = vmatpush1.bf16.msra.mxu0 %v383
  %980 = vmatprep.subr.bf16.mxu0 0
  %981 = vmatpush1.bf16.msra.mxu0 %v380
  %982 = vmatprep.subr.bf16.mxu0 0
  %983 = vmatpush1.bf16.msra.mxu0 %v377
  %984 = vmatprep.subr.bf16.mxu0 0
  %985 = vmatpush1.bf16.msra.mxu0 %v374
  %986 = vmatprep.subr.bf16.mxu0 0
  %987 = vmatpush1.bf16.msra.mxu0 %v371
  %988 = vmatprep.subr.bf16.mxu0 0
  %989 = vmatpush1.bf16.msra.mxu0 %v368
  %990 = vmatprep.subr.bf16.mxu0 0
  %991 = vmatpush1.bf16.msra.mxu0 %v365
  %992 = vmatprep.subr.bf16.mxu0 0
  %993 = vmatpush2.bf16.msra.mxu0 0
  %994 = vmatprep.subr.bf16.mxu0 0
  %995 = vmatpush2.bf16.msra.mxu0 0
  %996 = vmatprep.subr.bf16.mxu0 0
  %997 = vmatpush2.bf16.msra.mxu0 0
  %998 = vmatprep.subr.bf16.mxu0 0
  %999 = vmatpush2.bf16.msra.mxu0 0
  %1000 = vmatprep.subr.bf16.mxu0 0
  %1001 = vmatpush2.bf16.msra.mxu0 0
  %1002 = vmatprep.subr.bf16.mxu0 0
  %1003 = vmatpush2.bf16.msra.mxu0 0
  %1004 = vmatprep.subr.bf16.mxu0 0
  %1005 = vmatpush2.bf16.msra.mxu0 0
  %1006 = vmatprep.subr.bf16.mxu0 0
  %1007 = vmatpush2.bf16.msra.mxu0 0
  %1008 = vmatprep.mubr.bf16.mxu0 0
  %1009 = vmatmul.mubr.bf16.gmra.mxu0 %v934
  %v1010 = vpop.f32.mrf.mxu0
  %v1011 = vadd.f32 %v279, %v1010
  %v1012 = vpop.f32.mrf.mxu0
  %v1013 = vpop.f32.mrf.mxu0
  %v1014 = vpop.f32.mrf.mxu0
  %1015 = vdwg.mxu0
  %v1016 = vadd.f32 %v171, %v970
  %v1017 = vadd.f32 %v173, %v972
  %v1018 = vxor.u32 %v1016, 2147483648
  %v1019 = vxor.u32 %v1017, 2147483648
  %v1020 = vmul.f32 %v1018, 1.442695
  %v1021 = vpow.pop %v1020
  %v1022 = vmul.f32 %v1019, 1.442695
  %v1023 = vpow.pop %v1022
  %v1024 = vadd.f32 %v1021, 1.0
  %v1025 = vadd.f32 %v1023, 1.0
  %v1026 = vrcp.pop %v1024
  %v1027 = vmul.f32 1.0, %v1026
  %v1028 = vrcp.pop %v1025
  %v1029 = vmul.f32 1.0, %v1028
  %v1030 = vmul.f32 %v1027, %v1011
  %v1031 = vadd.f32 %v229, %v1030
  %v1032 = vtanh.pop %v1031
  %v1033 = vsub.f32 1.0, %v1029
  %v1034 = vmul.f32 %v1033, %v1032
  %v1035 = vmul.f32 %v1029, %v931
  %v1036 = vadd.f32 %v1034, %v1035
  %s1037 = scalar_lea.vmem [#allocation2], 40
  %1038 = vst [vmem:[%s1037] sm:$0xff] %v1036
  %1039 = vst [vmem:[%s13] sm:$0xff] %v1036
  %v1040 = vld [vmem:[#allocation2] sm:$0xff]
  %v1041 = vld [vmem:[#allocation2 + $0x8] sm:$0xff]
  %v1042 = vld [vmem:[#allocation2 + $0x10] sm:$0xff]
  %v1043 = vld [vmem:[#allocation2 + $0x18] sm:$0xff]
  %v1044 = vld [vmem:[#allocation2 + $0x20] sm:$0xff]
  %v1045 = vld [vmem:[#allocation2 + $0x28] sm:$0xff]
  %v1046 = vcombine.low %v1040, %v1042
  %v1047 = vcombine.high %v1040, %v1042
  %v1049 = vunpack.c.l.s4 1983009808
  %v1050 = vunpack.c.0.s8 %v1049
  %v1051 = vlaneseq
  %v1052 = vshrl.u32 %v1051, 7
  %v1053 = vsub.s32 %v1050, %v1052
  %v1054 = vrot.slane %v1046, %v1053
  %v1056 = vunpack.c.l.s4 1983009808
  %v1057 = vunpack.c.0.s8 %v1056
  %v1058 = vlaneseq
  %v1059 = vshrl.u32 %v1058, 7
  %v1060 = vsub.s32 %v1057, %v1059
  %v1061 = vrot.slane %v1047, %v1060
  %v1062 = vcombine.low %v1041, %v1043
  %v1063 = vcombine.high %v1041, %v1043
  %v1065 = vunpack.c.l.s4 1983009808
  %v1066 = vunpack.c.0.s8 %v1065
  %v1067 = vlaneseq
  %v1068 = vshrl.u32 %v1067, 7
  %v1069 = vsub.s32 %v1066, %v1068
  %v1070 = vrot.slane %v1062, %v1069
  %v1072 = vunpack.c.l.s4 1983009808
  %v1073 = vunpack.c.0.s8 %v1072
  %v1074 = vlaneseq
  %v1075 = vshrl.u32 %v1074, 7
  %v1076 = vsub.s32 %v1073, %v1075
  %v1077 = vrot.slane %v1063, %v1076
  %v1078 = vcombine.high %v1044, 0.0
  %v1080 = vunpack.c.l.s4 1983009808
  %v1081 = vunpack.c.0.s8 %v1080
  %v1082 = vlaneseq
  %v1083 = vshrl.u32 %v1082, 7
  %v1084 = vsub.s32 %v1081, %v1083
  %v1085 = vrot.slane %v1044, %v1084
  %v1087 = vunpack.c.l.s4 1983009808
  %v1088 = vunpack.c.0.s8 %v1087
  %v1089 = vlaneseq
  %v1090 = vshrl.u32 %v1089, 7
  %v1091 = vsub.s32 %v1088, %v1090
  %v1092 = vrot.slane %v1078, %v1091
  %v1093 = vcombine.high %v1045, 0.0
  %v1095 = vunpack.c.l.s4 1983009808
  %v1096 = vunpack.c.0.s8 %v1095
  %v1097 = vlaneseq
  %v1098 = vshrl.u32 %v1097, 7
  %v1099 = vsub.s32 %v1096, %v1098
  %v1100 = vrot.slane %v1045, %v1099
  %v1102 = vunpack.c.l.s4 1983009808
  %v1103 = vunpack.c.0.s8 %v1102
  %v1104 = vlaneseq
  %v1105 = vshrl.u32 %v1104, 7
  %v1106 = vsub.s32 %v1103, %v1105
  %v1107 = vrot.slane %v1093, %v1106
  %v1108 = vcombine.low %v1054, %v1070
  %v1109 = vcombine.high %v1054, %v1070
  %v1111 = vunpack.c.l.s4 1934713408
  %v1112 = vunpack.c.0.s8 %v1111
  %v1113 = vlaneseq
  %v1114 = vshrl.u32 %v1113, 7
  %v1115 = vsub.s32 %v1112, %v1114
  %v1116 = vrot.slane %v1108, %v1115
  %v1118 = vunpack.c.l.s4 1934713408
  %v1119 = vunpack.c.0.s8 %v1118
  %v1120 = vlaneseq
  %v1121 = vshrl.u32 %v1120, 7
  %v1122 = vsub.s32 %v1119, %v1121
  %v1123 = vrot.slane %v1109, %v1122
  %v1124 = vcombine.low %v1061, %v1077
  %v1125 = vcombine.high %v1061, %v1077
  %v1127 = vunpack.c.l.s4 1934713408
  %v1128 = vunpack.c.0.s8 %v1127
  %v1129 = vlaneseq
  %v1130 = vshrl.u32 %v1129, 7
  %v1131 = vsub.s32 %v1128, %v1130
  %v1132 = vrot.slane %v1124, %v1131
  %v1134 = vunpack.c.l.s4 1934713408
  %v1135 = vunpack.c.0.s8 %v1134
  %v1136 = vlaneseq
  %v1137 = vshrl.u32 %v1136, 7
  %v1138 = vsub.s32 %v1135, %v1137
  %v1139 = vrot.slane %v1125, %v1138
  %v1140 = vcombine.low %v1085, %v1100
  %v1141 = vcombine.high %v1085, %v1100
  %v1143 = vunpack.c.l.s4 1934713408
  %v1144 = vunpack.c.0.s8 %v1143
  %v1145 = vlaneseq
  %v1146 = vshrl.u32 %v1145, 7
  %v1147 = vsub.s32 %v1144, %v1146
  %v1148 = vrot.slane %v1140, %v1147
  %v1150 = vunpack.c.l.s4 1934713408
  %v1151 = vunpack.c.0.s8 %v1150
  %v1152 = vlaneseq
  %v1153 = vshrl.u32 %v1152, 7
  %v1154 = vsub.s32 %v1151, %v1153
  %v1155 = vrot.slane %v1141, %v1154
  %v1156 = vcombine.low %v1092, %v1107
  %v1157 = vcombine.high %v1092, %v1107
  %v1159 = vunpack.c.l.s4 1934713408
  %v1160 = vunpack.c.0.s8 %v1159
  %v1161 = vlaneseq
  %v1162 = vshrl.u32 %v1161, 7
  %v1163 = vsub.s32 %v1160, %v1162
  %v1164 = vrot.slane %v1156, %v1163
  %v1166 = vunpack.c.l.s4 1934713408
  %v1167 = vunpack.c.0.s8 %v1166
  %v1168 = vlaneseq
  %v1169 = vshrl.u32 %v1168, 7
  %v1170 = vsub.s32 %v1167, %v1169
  %v1171 = vrot.slane %v1157, %v1170
  %v1172 = vcombine.low %v1116, %v1148
  %v1173 = vcombine.high %v1116, %v1148
  %v1174 = vcombine.low %v1123, %v1155
  %v1175 = vcombine.high %v1123, %v1155
  %v1176 = vcombine.low %v1132, %v1164
  %v1177 = vcombine.high %v1132, %v1164
  %v1178 = vcombine.low %v1139, %v1171
  %v1179 = vcombine.high %v1139, %v1171
  %v1180 = vpack.c.bf16 %v1172, %v1172
  %v1181 = vpack.c.bf16 %v1173, %v1173
  %v1182 = vpack.c.bf16 %v1174, %v1174
  %v1183 = vpack.c.bf16 %v1175, %v1175
  %v1184 = vpack.c.bf16 %v1176, %v1176
  %v1185 = vpack.c.bf16 %v1177, %v1177
  %v1186 = vpack.c.bf16 %v1178, %v1178
  %v1187 = vpack.c.bf16 %v1179, %v1179
  %v1188 = vld [vmem:[%s6] sm:$0xf]
  %v1189 = vld [vmem:[%s6 + $0x4] sm:$0xf]
  %v1190 = vld [vmem:[%s6 + $0x8] sm:$0xf]
  %v1191 = vld [vmem:[%s6 + $0xc] sm:$0xf]
  %v1192 = vld [vmem:[%s6 + $0x10] sm:$0xf]
  %v1193 = vld [vmem:[%s6 + $0x14] sm:$0xf]
  %v1194 = vld [vmem:[%s6 + $0x18] sm:$0xf]
  %v1195 = vld [vmem:[%s6 + $0x1c] sm:$0xf]
  %1196 = vmatprep.subr.bf16.mxu0 0
  %1197 = vmatpush1.bf16.xpose.msra.mxu0 0
  %1198 = vmatprep.subr.bf16.mxu0 0
  %1199 = vmatpush1.bf16.xpose.msra.mxu0 0
  %1200 = vmatprep.subr.bf16.mxu0 0
  %1201 = vmatpush1.bf16.xpose.msra.mxu0 0
  %1202 = vmatprep.subr.bf16.mxu0 0
  %1203 = vmatpush1.bf16.xpose.msra.mxu0 0
  %1204 = vmatprep.subr.bf16.mxu0 0
  %1205 = vmatpush1.bf16.xpose.msra.mxu0 0
  %1206 = vmatprep.subr.bf16.mxu0 0
  %1207 = vmatpush1.bf16.xpose.msra.mxu0 0
  %1208 = vmatprep.subr.bf16.mxu0 0
  %1209 = vmatpush1.bf16.xpose.msra.mxu0 0
  %1210 = vmatprep.subr.bf16.mxu0 0
  %1211 = vmatpush1.bf16.xpose.msra.mxu0 %v1188
  %1212 = vmatprep.subr.bf16.mxu0 0
  %1213 = vmatpush2.bf16.xpose.msra.mxu0 0
  %1214 = vmatprep.subr.bf16.mxu0 0
  %1215 = vmatpush2.bf16.xpose.msra.mxu0 0
  %1216 = vmatprep.subr.bf16.mxu0 0
  %1217 = vmatpush2.bf16.xpose.msra.mxu0 0
  %1218 = vmatprep.subr.bf16.mxu0 0
  %1219 = vmatpush2.bf16.xpose.msra.mxu0 0
  %1220 = vmatprep.subr.bf16.mxu0 0
  %1221 = vmatpush2.bf16.xpose.msra.mxu0 0
  %1222 = vmatprep.subr.bf16.mxu0 0
  %1223 = vmatpush2.bf16.xpose.msra.mxu0 0
  %1224 = vmatprep.subr.bf16.mxu0 0
  %1225 = vmatpush2.bf16.xpose.msra.mxu0 0
  %1226 = vmatprep.subr.bf16.mxu0 0
  %1227 = vmatpush2.bf16.xpose.msra.mxu0 0
  %1228 = vmatprep.mubr.bf16.mxu0 0
  %1229 = vmatmul.mubr.bf16.gmra.mxu0 %v1180
  %v1230 = vpop.f32.mrf.mxu0
  %v1231 = vadd.f32 0.0, %v1230
  %v1232 = vpop.f32.mrf.mxu0
  %v1233 = vpop.f32.mrf.mxu0
  %v1234 = vpop.f32.mrf.mxu0
  %1235 = vdwg.mxu0
  %1236 = vmatprep.subr.bf16.mxu0 0
  %1237 = vmatpush1.bf16.xpose.msra.mxu0 0
  %1238 = vmatprep.subr.bf16.mxu0 0
  %1239 = vmatpush1.bf16.xpose.msra.mxu0 0
  %1240 = vmatprep.subr.bf16.mxu0 0
  %1241 = vmatpush1.bf16.xpose.msra.mxu0 0
  %1242 = vmatprep.subr.bf16.mxu0 0
  %1243 = vmatpush1.bf16.xpose.msra.mxu0 0
  %1244 = vmatprep.subr.bf16.mxu0 0
  %1245 = vmatpush1.bf16.xpose.msra.mxu0 0
  %1246 = vmatprep.subr.bf16.mxu0 0
  %1247 = vmatpush1.bf16.xpose.msra.mxu0 0
  %1248 = vmatprep.subr.bf16.mxu0 0
  %1249 = vmatpush1.bf16.xpose.msra.mxu0 0
  %1250 = vmatprep.subr.bf16.mxu0 0
  %1251 = vmatpush1.bf16.xpose.msra.mxu0 %v1189
  %1252 = vmatprep.subr.bf16.mxu0 0
  %1253 = vmatpush2.bf16.xpose.msra.mxu0 0
  %1254 = vmatprep.subr.bf16.mxu0 0
  %1255 = vmatpush2.bf16.xpose.msra.mxu0 0
  %1256 = vmatprep.subr.bf16.mxu0 0
  %1257 = vmatpush2.bf16.xpose.msra.mxu0 0
  %1258 = vmatprep.subr.bf16.mxu0 0
  %1259 = vmatpush2.bf16.xpose.msra.mxu0 0
  %1260 = vmatprep.subr.bf16.mxu0 0
  %1261 = vmatpush2.bf16.xpose.msra.mxu0 0
  %1262 = vmatprep.subr.bf16.mxu0 0
  %1263 = vmatpush2.bf16.xpose.msra.mxu0 0
  %1264 = vmatprep.subr.bf16.mxu0 0
  %1265 = vmatpush2.bf16.xpose.msra.mxu0 0
  %1266 = vmatprep.subr.bf16.mxu0 0
  %1267 = vmatpush2.bf16.xpose.msra.mxu0 0
  %1268 = vmatprep.mubr.bf16.mxu0 0
  %1269 = vmatmul.mubr.bf16.gmra.mxu0 %v1181
  %v1270 = vpop.f32.mrf.mxu0
  %v1271 = vadd.f32 0.0, %v1270
  %v1272 = vpop.f32.mrf.mxu0
  %v1273 = vpop.f32.mrf.mxu0
  %v1274 = vpop.f32.mrf.mxu0
  %1275 = vdwg.mxu0
  %1276 = vmatprep.subr.bf16.mxu0 0
  %1277 = vmatpush1.bf16.xpose.msra.mxu0 0
  %1278 = vmatprep.subr.bf16.mxu0 0
  %1279 = vmatpush1.bf16.xpose.msra.mxu0 0
  %1280 = vmatprep.subr.bf16.mxu0 0
  %1281 = vmatpush1.bf16.xpose.msra.mxu0 0
  %1282 = vmatprep.subr.bf16.mxu0 0
  %1283 = vmatpush1.bf16.xpose.msra.mxu0 0
  %1284 = vmatprep.subr.bf16.mxu0 0
  %1285 = vmatpush1.bf16.xpose.msra.mxu0 0
  %1286 = vmatprep.subr.bf16.mxu0 0
  %1287 = vmatpush1.bf16.xpose.msra.mxu0 0
  %1288 = vmatprep.subr.bf16.mxu0 0
  %1289 = vmatpush1.bf16.xpose.msra.mxu0 0
  %1290 = vmatprep.subr.bf16.mxu0 0
  %1291 = vmatpush1.bf16.xpose.msra.mxu0 %v1190
  %1292 = vmatprep.subr.bf16.mxu0 0
  %1293 = vmatpush2.bf16.xpose.msra.mxu0 0
  %1294 = vmatprep.subr.bf16.mxu0 0
  %1295 = vmatpush2.bf16.xpose.msra.mxu0 0
  %1296 = vmatprep.subr.bf16.mxu0 0
  %1297 = vmatpush2.bf16.xpose.msra.mxu0 0
  %1298 = vmatprep.subr.bf16.mxu0 0
  %1299 = vmatpush2.bf16.xpose.msra.mxu0 0
  %1300 = vmatprep.subr.bf16.mxu0 0
  %1301 = vmatpush2.bf16.xpose.msra.mxu0 0
  %1302 = vmatprep.subr.bf16.mxu0 0
  %1303 = vmatpush2.bf16.xpose.msra.mxu0 0
  %1304 = vmatprep.subr.bf16.mxu0 0
  %1305 = vmatpush2.bf16.xpose.msra.mxu0 0
  %1306 = vmatprep.subr.bf16.mxu0 0
  %1307 = vmatpush2.bf16.xpose.msra.mxu0 0
  %1308 = vmatprep.mubr.bf16.mxu0 0
  %1309 = vmatmul.mubr.bf16.gmra.mxu0 %v1182
  %v1310 = vpop.f32.mrf.mxu0
  %v1311 = vadd.f32 0.0, %v1310
  %v1312 = vpop.f32.mrf.mxu0
  %v1313 = vpop.f32.mrf.mxu0
  %v1314 = vpop.f32.mrf.mxu0
  %1315 = vdwg.mxu0
  %1316 = vmatprep.subr.bf16.mxu0 0
  %1317 = vmatpush1.bf16.xpose.msra.mxu0 0
  %1318 = vmatprep.subr.bf16.mxu0 0
  %1319 = vmatpush1.bf16.xpose.msra.mxu0 0
  %1320 = vmatprep.subr.bf16.mxu0 0
  %1321 = vmatpush1.bf16.xpose.msra.mxu0 0
  %1322 = vmatprep.subr.bf16.mxu0 0
  %1323 = vmatpush1.bf16.xpose.msra.mxu0 0
  %1324 = vmatprep.subr.bf16.mxu0 0
  %1325 = vmatpush1.bf16.xpose.msra.mxu0 0
  %1326 = vmatprep.subr.bf16.mxu0 0
  %1327 = vmatpush1.bf16.xpose.msra.mxu0 0
  %1328 = vmatprep.subr.bf16.mxu0 0
  %1329 = vmatpush1.bf16.xpose.msra.mxu0 0
  %1330 = vmatprep.subr.bf16.mxu0 0
  %1331 = vmatpush1.bf16.xpose.msra.mxu0 %v1191
  %1332 = vmatprep.subr.bf16.mxu0 0
  %1333 = vmatpush2.bf16.xpose.msra.mxu0 0
  %1334 = vmatprep.subr.bf16.mxu0 0
  %1335 = vmatpush2.bf16.xpose.msra.mxu0 0
  %1336 = vmatprep.subr.bf16.mxu0 0
  %1337 = vmatpush2.bf16.xpose.msra.mxu0 0
  %1338 = vmatprep.subr.bf16.mxu0 0
  %1339 = vmatpush2.bf16.xpose.msra.mxu0 0
  %1340 = vmatprep.subr.bf16.mxu0 0
  %1341 = vmatpush2.bf16.xpose.msra.mxu0 0
  %1342 = vmatprep.subr.bf16.mxu0 0
  %1343 = vmatpush2.bf16.xpose.msra.mxu0 0
  %1344 = vmatprep.subr.bf16.mxu0 0
  %1345 = vmatpush2.bf16.xpose.msra.mxu0 0
  %1346 = vmatprep.subr.bf16.mxu0 0
  %1347 = vmatpush2.bf16.xpose.msra.mxu0 0
  %1348 = vmatprep.mubr.bf16.mxu0 0
  %1349 = vmatmul.mubr.bf16.gmra.mxu0 %v1183
  %v1350 = vpop.f32.mrf.mxu0
  %v1351 = vadd.f32 0.0, %v1350
  %v1352 = vpop.f32.mrf.mxu0
  %v1353 = vpop.f32.mrf.mxu0
  %v1354 = vpop.f32.mrf.mxu0
  %1355 = vdwg.mxu0
  %1356 = vmatprep.subr.bf16.mxu0 0
  %1357 = vmatpush1.bf16.xpose.msra.mxu0 0
  %1358 = vmatprep.subr.bf16.mxu0 0
  %1359 = vmatpush1.bf16.xpose.msra.mxu0 0
  %1360 = vmatprep.subr.bf16.mxu0 0
  %1361 = vmatpush1.bf16.xpose.msra.mxu0 0
  %1362 = vmatprep.subr.bf16.mxu0 0
  %1363 = vmatpush1.bf16.xpose.msra.mxu0 0
  %1364 = vmatprep.subr.bf16.mxu0 0
  %1365 = vmatpush1.bf16.xpose.msra.mxu0 0
  %1366 = vmatprep.subr.bf16.mxu0 0
  %1367 = vmatpush1.bf16.xpose.msra.mxu0 0
  %1368 = vmatprep.subr.bf16.mxu0 0
  %1369 = vmatpush1.bf16.xpose.msra.mxu0 0
  %1370 = vmatprep.subr.bf16.mxu0 0
  %1371 = vmatpush1.bf16.xpose.msra.mxu0 %v1192
  %1372 = vmatprep.subr.bf16.mxu0 0
  %1373 = vmatpush2.bf16.xpose.msra.mxu0 0
  %1374 = vmatprep.subr.bf16.mxu0 0
  %1375 = vmatpush2.bf16.xpose.msra.mxu0 0
  %1376 = vmatprep.subr.bf16.mxu0 0
  %1377 = vmatpush2.bf16.xpose.msra.mxu0 0
  %1378 = vmatprep.subr.bf16.mxu0 0
  %1379 = vmatpush2.bf16.xpose.msra.mxu0 0
  %1380 = vmatprep.subr.bf16.mxu0 0
  %1381 = vmatpush2.bf16.xpose.msra.mxu0 0
  %1382 = vmatprep.subr.bf16.mxu0 0
  %1383 = vmatpush2.bf16.xpose.msra.mxu0 0
  %1384 = vmatprep.subr.bf16.mxu0 0
  %1385 = vmatpush2.bf16.xpose.msra.mxu0 0
  %1386 = vmatprep.subr.bf16.mxu0 0
  %1387 = vmatpush2.bf16.xpose.msra.mxu0 0
  %1388 = vmatprep.mubr.bf16.mxu0 0
  %1389 = vmatmul.mubr.bf16.gmra.mxu0 %v1184
  %v1390 = vpop.f32.mrf.mxu0
  %v1391 = vadd.f32 0.0, %v1390
  %v1392 = vpop.f32.mrf.mxu0
  %v1393 = vpop.f32.mrf.mxu0
  %v1394 = vpop.f32.mrf.mxu0
  %1395 = vdwg.mxu0
  %1396 = vmatprep.subr.bf16.mxu0 0
  %1397 = vmatpush1.bf16.xpose.msra.mxu0 0
  %1398 = vmatprep.subr.bf16.mxu0 0
  %1399 = vmatpush1.bf16.xpose.msra.mxu0 0
  %1400 = vmatprep.subr.bf16.mxu0 0
  %1401 = vmatpush1.bf16.xpose.msra.mxu0 0
  %1402 = vmatprep.subr.bf16.mxu0 0
  %1403 = vmatpush1.bf16.xpose.msra.mxu0 0
  %1404 = vmatprep.subr.bf16.mxu0 0
  %1405 = vmatpush1.bf16.xpose.msra.mxu0 0
  %1406 = vmatprep.subr.bf16.mxu0 0
  %1407 = vmatpush1.bf16.xpose.msra.mxu0 0
  %1408 = vmatprep.subr.bf16.mxu0 0
  %1409 = vmatpush1.bf16.xpose.msra.mxu0 0
  %1410 = vmatprep.subr.bf16.mxu0 0
  %1411 = vmatpush1.bf16.xpose.msra.mxu0 %v1193
  %1412 = vmatprep.subr.bf16.mxu0 0
  %1413 = vmatpush2.bf16.xpose.msra.mxu0 0
  %1414 = vmatprep.subr.bf16.mxu0 0
  %1415 = vmatpush2.bf16.xpose.msra.mxu0 0
  %1416 = vmatprep.subr.bf16.mxu0 0
  %1417 = vmatpush2.bf16.xpose.msra.mxu0 0
  %1418 = vmatprep.subr.bf16.mxu0 0
  %1419 = vmatpush2.bf16.xpose.msra.mxu0 0
  %1420 = vmatprep.subr.bf16.mxu0 0
  %1421 = vmatpush2.bf16.xpose.msra.mxu0 0
  %1422 = vmatprep.subr.bf16.mxu0 0
  %1423 = vmatpush2.bf16.xpose.msra.mxu0 0
  %1424 = vmatprep.subr.bf16.mxu0 0
  %1425 = vmatpush2.bf16.xpose.msra.mxu0 0
  %1426 = vmatprep.subr.bf16.mxu0 0
  %1427 = vmatpush2.bf16.xpose.msra.mxu0 0
  %1428 = vmatprep.mubr.bf16.mxu0 0
  %1429 = vmatmul.mubr.bf16.gmra.mxu0 %v1185
  %v1430 = vpop.f32.mrf.mxu0
  %v1431 = vadd.f32 0.0, %v1430
  %v1432 = vpop.f32.mrf.mxu0
  %v1433 = vpop.f32.mrf.mxu0
  %v1434 = vpop.f32.mrf.mxu0
  %1435 = vdwg.mxu0
  %1436 = vmatprep.subr.bf16.mxu0 0
  %1437 = vmatpush1.bf16.xpose.msra.mxu0 0
  %1438 = vmatprep.subr.bf16.mxu0 0
  %1439 = vmatpush1.bf16.xpose.msra.mxu0 0
  %1440 = vmatprep.subr.bf16.mxu0 0
  %1441 = vmatpush1.bf16.xpose.msra.mxu0 0
  %1442 = vmatprep.subr.bf16.mxu0 0
  %1443 = vmatpush1.bf16.xpose.msra.mxu0 0
  %1444 = vmatprep.subr.bf16.mxu0 0
  %1445 = vmatpush1.bf16.xpose.msra.mxu0 0
  %1446 = vmatprep.subr.bf16.mxu0 0
  %1447 = vmatpush1.bf16.xpose.msra.mxu0 0
  %1448 = vmatprep.subr.bf16.mxu0 0
  %1449 = vmatpush1.bf16.xpose.msra.mxu0 0
  %1450 = vmatprep.subr.bf16.mxu0 0
  %1451 = vmatpush1.bf16.xpose.msra.mxu0 %v1194
  %1452 = vmatprep.subr.bf16.mxu0 0
  %1453 = vmatpush2.bf16.xpose.msra.mxu0 0
  %1454 = vmatprep.subr.bf16.mxu0 0
  %1455 = vmatpush2.bf16.xpose.msra.mxu0 0
  %1456 = vmatprep.subr.bf16.mxu0 0
  %1457 = vmatpush2.bf16.xpose.msra.mxu0 0
  %1458 = vmatprep.subr.bf16.mxu0 0
  %1459 = vmatpush2.bf16.xpose.msra.mxu0 0
  %1460 = vmatprep.subr.bf16.mxu0 0
  %1461 = vmatpush2.bf16.xpose.msra.mxu0 0
  %1462 = vmatprep.subr.bf16.mxu0 0
  %1463 = vmatpush2.bf16.xpose.msra.mxu0 0
  %1464 = vmatprep.subr.bf16.mxu0 0
  %1465 = vmatpush2.bf16.xpose.msra.mxu0 0
  %1466 = vmatprep.subr.bf16.mxu0 0
  %1467 = vmatpush2.bf16.xpose.msra.mxu0 0
  %1468 = vmatprep.mubr.bf16.mxu0 0
  %1469 = vmatmul.mubr.bf16.gmra.mxu0 %v1186
  %v1470 = vpop.f32.mrf.mxu0
  %v1471 = vadd.f32 0.0, %v1470
  %v1472 = vpop.f32.mrf.mxu0
  %v1473 = vpop.f32.mrf.mxu0
  %v1474 = vpop.f32.mrf.mxu0
  %1475 = vdwg.mxu0
  %1476 = vmatprep.subr.bf16.mxu0 0
  %1477 = vmatpush1.bf16.xpose.msra.mxu0 0
  %1478 = vmatprep.subr.bf16.mxu0 0
  %1479 = vmatpush1.bf16.xpose.msra.mxu0 0
  %1480 = vmatprep.subr.bf16.mxu0 0
  %1481 = vmatpush1.bf16.xpose.msra.mxu0 0
  %1482 = vmatprep.subr.bf16.mxu0 0
  %1483 = vmatpush1.bf16.xpose.msra.mxu0 0
  %1484 = vmatprep.subr.bf16.mxu0 0
  %1485 = vmatpush1.bf16.xpose.msra.mxu0 0
  %1486 = vmatprep.subr.bf16.mxu0 0
  %1487 = vmatpush1.bf16.xpose.msra.mxu0 0
  %1488 = vmatprep.subr.bf16.mxu0 0
  %1489 = vmatpush1.bf16.xpose.msra.mxu0 0
  %1490 = vmatprep.subr.bf16.mxu0 0
  %1491 = vmatpush1.bf16.xpose.msra.mxu0 %v1195
  %1492 = vmatprep.subr.bf16.mxu0 0
  %1493 = vmatpush2.bf16.xpose.msra.mxu0 0
  %1494 = vmatprep.subr.bf16.mxu0 0
  %1495 = vmatpush2.bf16.xpose.msra.mxu0 0
  %1496 = vmatprep.subr.bf16.mxu0 0
  %1497 = vmatpush2.bf16.xpose.msra.mxu0 0
  %1498 = vmatprep.subr.bf16.mxu0 0
  %1499 = vmatpush2.bf16.xpose.msra.mxu0 0
  %1500 = vmatprep.subr.bf16.mxu0 0
  %1501 = vmatpush2.bf16.xpose.msra.mxu0 0
  %1502 = vmatprep.subr.bf16.mxu0 0
  %1503 = vmatpush2.bf16.xpose.msra.mxu0 0
  %1504 = vmatprep.subr.bf16.mxu0 0
  %1505 = vmatpush2.bf16.xpose.msra.mxu0 0
  %1506 = vmatprep.subr.bf16.mxu0 0
  %1507 = vmatpush2.bf16.xpose.msra.mxu0 0
  %1508 = vmatprep.mubr.bf16.mxu0 0
  %1509 = vmatmul.mubr.bf16.gmra.mxu0 %v1187
  %v1510 = vpop.f32.mrf.mxu0
  %v1511 = vadd.f32 0.0, %v1510
  %v1512 = vpop.f32.mrf.mxu0
  %v1513 = vpop.f32.mrf.mxu0
  %v1514 = vpop.f32.mrf.mxu0
  %1515 = vdwg.mxu0
  %vm1516 = vcmask 62464
  %v1517 = vsel %vm1516, %v1231, -inf
  %1518 = vmax.xlane.f32.xlu0 %v1517
  %v1519 = vpop.xlane.xlu0 %1518
  %v1520 = vsel %vm1516, %v1271, -inf
  %1521 = vmax.xlane.f32.xlu0 %v1520
  %v1522 = vpop.xlane.xlu0 %1521
  %v1523 = vsel %vm1516, %v1311, -inf
  %1524 = vmax.xlane.f32.xlu0 %v1523
  %v1525 = vpop.xlane.xlu0 %1524
  %v1526 = vsel %vm1516, %v1351, -inf
  %1527 = vmax.xlane.f32.xlu0 %v1526
  %v1528 = vpop.xlane.xlu0 %1527
  %v1529 = vsel %vm1516, %v1391, -inf
  %1530 = vmax.xlane.f32.xlu0 %v1529
  %v1531 = vpop.xlane.xlu0 %1530
  %v1532 = vsel %vm1516, %v1431, -inf
  %1533 = vmax.xlane.f32.xlu0 %v1532
  %v1534 = vpop.xlane.xlu0 %1533
  %v1535 = vsel %vm1516, %v1471, -inf
  %1536 = vmax.xlane.f32.xlu0 %v1535
  %v1537 = vpop.xlane.xlu0 %1536
  %v1538 = vsel %vm1516, %v1511, -inf
  %1539 = vmax.xlane.f32.xlu0 %v1538
  %v1540 = vpop.xlane.xlu0 %1539
  %v1541 = vsub.f32 %v1231, %v1519
  %v1542 = vsub.f32 %v1271, %v1522
  %v1543 = vsub.f32 %v1311, %v1525
  %v1544 = vsub.f32 %v1351, %v1528
  %v1545 = vsub.f32 %v1391, %v1531
  %v1546 = vsub.f32 %v1431, %v1534
  %v1547 = vsub.f32 %v1471, %v1537
  %v1548 = vsub.f32 %v1511, %v1540
  %v1549 = vmul.f32 %v1541, 1.442695
  %v1550 = vpow.pop %v1549
  %v1551 = vmul.f32 %v1542, 1.442695
  %v1552 = vpow.pop %v1551
  %v1553 = vmul.f32 %v1543, 1.442695
  %v1554 = vpow.pop %v1553
  %v1555 = vmul.f32 %v1544, 1.442695
  %v1556 = vpow.pop %v1555
  %v1557 = vmul.f32 %v1545, 1.442695
  %v1558 = vpow.pop %v1557
  %v1559 = vmul.f32 %v1546, 1.442695
  %v1560 = vpow.pop %v1559
  %v1561 = vmul.f32 %v1547, 1.442695
  %v1562 = vpow.pop %v1561
  %v1563 = vmul.f32 %v1548, 1.442695
  %v1564 = vpow.pop %v1563
  %v1565 = vsel %vm1516, %v1550, 0.0
  %1566 = vadd.xlane.f32.xlu0 %v1565
  %v1567 = vpop.xlane.xlu0 %1566
  %v1568 = vsel %vm1516, %v1552, 0.0
  %1569 = vadd.xlane.f32.xlu0 %v1568
  %v1570 = vpop.xlane.xlu0 %1569
  %v1571 = vsel %vm1516, %v1554, 0.0
  %1572 = vadd.xlane.f32.xlu0 %v1571
  %v1573 = vpop.xlane.xlu0 %1572
  %v1574 = vsel %vm1516, %v1556, 0.0
  %1575 = vadd.xlane.f32.xlu0 %v1574
  %v1576 = vpop.xlane.xlu0 %1575
  %v1577 = vsel %vm1516, %v1558, 0.0
  %1578 = vadd.xlane.f32.xlu0 %v1577
  %v1579 = vpop.xlane.xlu0 %1578
  %v1580 = vsel %vm1516, %v1560, 0.0
  %1581 = vadd.xlane.f32.xlu0 %v1580
  %v1582 = vpop.xlane.xlu0 %1581
  %v1583 = vsel %vm1516, %v1562, 0.0
  %1584 = vadd.xlane.f32.xlu0 %v1583
  %v1585 = vpop.xlane.xlu0 %1584
  %v1586 = vsel %vm1516, %v1564, 0.0
  %1587 = vadd.xlane.f32.xlu0 %v1586
  %v1588 = vpop.xlane.xlu0 %1587
  %v1589 = vrcp.pop %v1567
  %v1590 = vrcp.pop %v1570
  %v1591 = vrcp.pop %v1573
  %v1592 = vrcp.pop %v1576
  %v1593 = vrcp.pop %v1579
  %v1594 = vrcp.pop %v1582
  %v1595 = vrcp.pop %v1585
  %v1596 = vrcp.pop %v1588
  %v1597 = vmul.f32 %v1550, %v1589
  %v1598 = vmul.f32 %v1552, %v1590
  %v1599 = vmul.f32 %v1554, %v1591
  %v1600 = vmul.f32 %v1556, %v1592
  %v1601 = vmul.f32 %v1558, %v1593
  %v1602 = vmul.f32 %v1560, %v1594
  %v1603 = vmul.f32 %v1562, %v1595
  %v1604 = vmul.f32 %v1564, %v1596
  %v1605 = vpack.c.bf16 %v1597, %v1597
  %v1606 = vpack.c.bf16 %v1598, %v1598
  %v1607 = vpack.c.bf16 %v1599, %v1599
  %v1608 = vpack.c.bf16 %v1600, %v1600
  %v1609 = vpack.c.bf16 %v1601, %v1601
  %v1610 = vpack.c.bf16 %v1602, %v1602
  %v1611 = vpack.c.bf16 %v1603, %v1603
  %v1612 = vpack.c.bf16 %v1604, %v1604
  %vm1613 = vcmask 64512
  %v1615 = vsel %vm1613, %v1605, 0
  %vm1617 = vcmask 1043456
  %v1619 = vsel %vm1617, %v1188, 0
  %1621 = vmatprep.subr.bf16.mxu0 0
  %1622 = vmatpush1.bf16.msra.mxu0 0
  %1623 = vmatprep.subr.bf16.mxu0 0
  %1624 = vmatpush1.bf16.msra.mxu0 0
  %1625 = vmatprep.subr.bf16.mxu0 0
  %1626 = vmatpush1.bf16.msra.mxu0 0
  %1627 = vmatprep.subr.bf16.mxu0 0
  %1628 = vmatpush1.bf16.msra.mxu0 0
  %1629 = vmatprep.subr.bf16.mxu0 0
  %1630 = vmatpush1.bf16.msra.mxu0 0
  %1631 = vmatprep.subr.bf16.mxu0 0
  %1632 = vmatpush1.bf16.msra.mxu0 0
  %1633 = vmatprep.subr.bf16.mxu0 0
  %1634 = vmatpush1.bf16.msra.mxu0 0
  %1635 = vmatprep.subr.bf16.mxu0 0
  %1636 = vmatpush1.bf16.msra.mxu0 %v1619
  %1637 = vmatprep.subr.bf16.mxu0 0
  %1638 = vmatpush2.bf16.msra.mxu0 0
  %1639 = vmatprep.subr.bf16.mxu0 0
  %1640 = vmatpush2.bf16.msra.mxu0 0
  %1641 = vmatprep.subr.bf16.mxu0 0
  %1642 = vmatpush2.bf16.msra.mxu0 0
  %1643 = vmatprep.subr.bf16.mxu0 0
  %1644 = vmatpush2.bf16.msra.mxu0 0
  %1645 = vmatprep.subr.bf16.mxu0 0
  %1646 = vmatpush2.bf16.msra.mxu0 0
  %1647 = vmatprep.subr.bf16.mxu0 0
  %1648 = vmatpush2.bf16.msra.mxu0 0
  %1649 = vmatprep.subr.bf16.mxu0 0
  %1650 = vmatpush2.bf16.msra.mxu0 0
  %1651 = vmatprep.subr.bf16.mxu0 0
  %1652 = vmatpush2.bf16.msra.mxu0 0
  %1653 = vmatprep.mubr.bf16.mxu0 0
  %1654 = vmatmul.mubr.bf16.gmra.mxu0 %v1615
  %v1655 = vpop.f32.mrf.mxu0
  %v1656 = vadd.f32 0.0, %v1655
  %v1657 = vpop.f32.mrf.mxu0
  %v1658 = vpop.f32.mrf.mxu0
  %v1659 = vpop.f32.mrf.mxu0
  %1660 = vdwg.mxu0
  %v1662 = vsel %vm1613, %v1606, 0
  %v1665 = vsel %vm1617, %v1189, 0
  %1667 = vmatprep.subr.bf16.mxu0 0
  %1668 = vmatpush1.bf16.msra.mxu0 0
  %1669 = vmatprep.subr.bf16.mxu0 0
  %1670 = vmatpush1.bf16.msra.mxu0 0
  %1671 = vmatprep.subr.bf16.mxu0 0
  %1672 = vmatpush1.bf16.msra.mxu0 0
  %1673 = vmatprep.subr.bf16.mxu0 0
  %1674 = vmatpush1.bf16.msra.mxu0 0
  %1675 = vmatprep.subr.bf16.mxu0 0
  %1676 = vmatpush1.bf16.msra.mxu0 0
  %1677 = vmatprep.subr.bf16.mxu0 0
  %1678 = vmatpush1.bf16.msra.mxu0 0
  %1679 = vmatprep.subr.bf16.mxu0 0
  %1680 = vmatpush1.bf16.msra.mxu0 0
  %1681 = vmatprep.subr.bf16.mxu0 0
  %1682 = vmatpush1.bf16.msra.mxu0 %v1665
  %1683 = vmatprep.subr.bf16.mxu0 0
  %1684 = vmatpush2.bf16.msra.mxu0 0
  %1685 = vmatprep.subr.bf16.mxu0 0
  %1686 = vmatpush2.bf16.msra.mxu0 0
  %1687 = vmatprep.subr.bf16.mxu0 0
  %1688 = vmatpush2.bf16.msra.mxu0 0
  %1689 = vmatprep.subr.bf16.mxu0 0
  %1690 = vmatpush2.bf16.msra.mxu0 0
  %1691 = vmatprep.subr.bf16.mxu0 0
  %1692 = vmatpush2.bf16.msra.mxu0 0
  %1693 = vmatprep.subr.bf16.mxu0 0
  %1694 = vmatpush2.bf16.msra.mxu0 0
  %1695 = vmatprep.subr.bf16.mxu0 0
  %1696 = vmatpush2.bf16.msra.mxu0 0
  %1697 = vmatprep.subr.bf16.mxu0 0
  %1698 = vmatpush2.bf16.msra.mxu0 0
  %1699 = vmatprep.mubr.bf16.mxu0 0
  %1700 = vmatmul.mubr.bf16.gmra.mxu0 %v1662
  %v1701 = vpop.f32.mrf.mxu0
  %v1702 = vadd.f32 0.0, %v1701
  %v1703 = vpop.f32.mrf.mxu0
  %v1704 = vpop.f32.mrf.mxu0
  %v1705 = vpop.f32.mrf.mxu0
  %1706 = vdwg.mxu0
  %v1708 = vsel %vm1613, %v1607, 0
  %v1711 = vsel %vm1617, %v1190, 0
  %1713 = vmatprep.subr.bf16.mxu0 0
  %1714 = vmatpush1.bf16.msra.mxu0 0
  %1715 = vmatprep.subr.bf16.mxu0 0
  %1716 = vmatpush1.bf16.msra.mxu0 0
  %1717 = vmatprep.subr.bf16.mxu0 0
  %1718 = vmatpush1.bf16.msra.mxu0 0
  %1719 = vmatprep.subr.bf16.mxu0 0
  %1720 = vmatpush1.bf16.msra.mxu0 0
  %1721 = vmatprep.subr.bf16.mxu0 0
  %1722 = vmatpush1.bf16.msra.mxu0 0
  %1723 = vmatprep.subr.bf16.mxu0 0
  %1724 = vmatpush1.bf16.msra.mxu0 0
  %1725 = vmatprep.subr.bf16.mxu0 0
  %1726 = vmatpush1.bf16.msra.mxu0 0
  %1727 = vmatprep.subr.bf16.mxu0 0
  %1728 = vmatpush1.bf16.msra.mxu0 %v1711
  %1729 = vmatprep.subr.bf16.mxu0 0
  %1730 = vmatpush2.bf16.msra.mxu0 0
  %1731 = vmatprep.subr.bf16.mxu0 0
  %1732 = vmatpush2.bf16.msra.mxu0 0
  %1733 = vmatprep.subr.bf16.mxu0 0
  %1734 = vmatpush2.bf16.msra.mxu0 0
  %1735 = vmatprep.subr.bf16.mxu0 0
  %1736 = vmatpush2.bf16.msra.mxu0 0
  %1737 = vmatprep.subr.bf16.mxu0 0
  %1738 = vmatpush2.bf16.msra.mxu0 0
  %1739 = vmatprep.subr.bf16.mxu0 0
  %1740 = vmatpush2.bf16.msra.mxu0 0
  %1741 = vmatprep.subr.bf16.mxu0 0
  %1742 = vmatpush2.bf16.msra.mxu0 0
  %1743 = vmatprep.subr.bf16.mxu0 0
  %1744 = vmatpush2.bf16.msra.mxu0 0
  %1745 = vmatprep.mubr.bf16.mxu0 0
  %1746 = vmatmul.mubr.bf16.gmra.mxu0 %v1708
  %v1747 = vpop.f32.mrf.mxu0
  %v1748 = vadd.f32 0.0, %v1747
  %v1749 = vpop.f32.mrf.mxu0
  %v1750 = vpop.f32.mrf.mxu0
  %v1751 = vpop.f32.mrf.mxu0
  %1752 = vdwg.mxu0
  %v1754 = vsel %vm1613, %v1608, 0
  %v1757 = vsel %vm1617, %v1191, 0
  %1759 = vmatprep.subr.bf16.mxu0 0
  %1760 = vmatpush1.bf16.msra.mxu0 0
  %1761 = vmatprep.subr.bf16.mxu0 0
  %1762 = vmatpush1.bf16.msra.mxu0 0
  %1763 = vmatprep.subr.bf16.mxu0 0
  %1764 = vmatpush1.bf16.msra.mxu0 0
  %1765 = vmatprep.subr.bf16.mxu0 0
  %1766 = vmatpush1.bf16.msra.mxu0 0
  %1767 = vmatprep.subr.bf16.mxu0 0
  %1768 = vmatpush1.bf16.msra.mxu0 0
  %1769 = vmatprep.subr.bf16.mxu0 0
  %1770 = vmatpush1.bf16.msra.mxu0 0
  %1771 = vmatprep.subr.bf16.mxu0 0
  %1772 = vmatpush1.bf16.msra.mxu0 0
  %1773 = vmatprep.subr.bf16.mxu0 0
  %1774 = vmatpush1.bf16.msra.mxu0 %v1757
  %1775 = vmatprep.subr.bf16.mxu0 0
  %1776 = vmatpush2.bf16.msra.mxu0 0
  %1777 = vmatprep.subr.bf16.mxu0 0
  %1778 = vmatpush2.bf16.msra.mxu0 0
  %1779 = vmatprep.subr.bf16.mxu0 0
  %1780 = vmatpush2.bf16.msra.mxu0 0
  %1781 = vmatprep.subr.bf16.mxu0 0
  %1782 = vmatpush2.bf16.msra.mxu0 0
  %1783 = vmatprep.subr.bf16.mxu0 0
  %1784 = vmatpush2.bf16.msra.mxu0 0
  %1785 = vmatprep.subr.bf16.mxu0 0
  %1786 = vmatpush2.bf16.msra.mxu0 0
  %1787 = vmatprep.subr.bf16.mxu0 0
  %1788 = vmatpush2.bf16.msra.mxu0 0
  %1789 = vmatprep.subr.bf16.mxu0 0
  %1790 = vmatpush2.bf16.msra.mxu0 0
  %1791 = vmatprep.mubr.bf16.mxu0 0
  %1792 = vmatmul.mubr.bf16.gmra.mxu0 %v1754
  %v1793 = vpop.f32.mrf.mxu0
  %v1794 = vadd.f32 0.0, %v1793
  %v1795 = vpop.f32.mrf.mxu0
  %v1796 = vpop.f32.mrf.mxu0
  %v1797 = vpop.f32.mrf.mxu0
  %1798 = vdwg.mxu0
  %v1800 = vsel %vm1613, %v1609, 0
  %v1803 = vsel %vm1617, %v1192, 0
  %1805 = vmatprep.subr.bf16.mxu0 0
  %1806 = vmatpush1.bf16.msra.mxu0 0
  %1807 = vmatprep.subr.bf16.mxu0 0
  %1808 = vmatpush1.bf16.msra.mxu0 0
  %1809 = vmatprep.subr.bf16.mxu0 0
  %1810 = vmatpush1.bf16.msra.mxu0 0
  %1811 = vmatprep.subr.bf16.mxu0 0
  %1812 = vmatpush1.bf16.msra.mxu0 0
  %1813 = vmatprep.subr.bf16.mxu0 0
  %1814 = vmatpush1.bf16.msra.mxu0 0
  %1815 = vmatprep.subr.bf16.mxu0 0
  %1816 = vmatpush1.bf16.msra.mxu0 0
  %1817 = vmatprep.subr.bf16.mxu0 0
  %1818 = vmatpush1.bf16.msra.mxu0 0
  %1819 = vmatprep.subr.bf16.mxu0 0
  %1820 = vmatpush1.bf16.msra.mxu0 %v1803
  %1821 = vmatprep.subr.bf16.mxu0 0
  %1822 = vmatpush2.bf16.msra.mxu0 0
  %1823 = vmatprep.subr.bf16.mxu0 0
  %1824 = vmatpush2.bf16.msra.mxu0 0
  %1825 = vmatprep.subr.bf16.mxu0 0
  %1826 = vmatpush2.bf16.msra.mxu0 0
  %1827 = vmatprep.subr.bf16.mxu0 0
  %1828 = vmatpush2.bf16.msra.mxu0 0
  %1829 = vmatprep.subr.bf16.mxu0 0
  %1830 = vmatpush2.bf16.msra.mxu0 0
  %1831 = vmatprep.subr.bf16.mxu0 0
  %1832 = vmatpush2.bf16.msra.mxu0 0
  %1833 = vmatprep.subr.bf16.mxu0 0
  %1834 = vmatpush2.bf16.msra.mxu0 0
  %1835 = vmatprep.subr.bf16.mxu0 0
  %1836 = vmatpush2.bf16.msra.mxu0 0
  %1837 = vmatprep.mubr.bf16.mxu0 0
  %1838 = vmatmul.mubr.bf16.gmra.mxu0 %v1800
  %v1839 = vpop.f32.mrf.mxu0
  %v1840 = vadd.f32 0.0, %v1839
  %v1841 = vpop.f32.mrf.mxu0
  %v1842 = vpop.f32.mrf.mxu0
  %v1843 = vpop.f32.mrf.mxu0
  %1844 = vdwg.mxu0
  %v1846 = vsel %vm1613, %v1610, 0
  %v1849 = vsel %vm1617, %v1193, 0
  %1851 = vmatprep.subr.bf16.mxu0 0
  %1852 = vmatpush1.bf16.msra.mxu0 0
  %1853 = vmatprep.subr.bf16.mxu0 0
  %1854 = vmatpush1.bf16.msra.mxu0 0
  %1855 = vmatprep.subr.bf16.mxu0 0
  %1856 = vmatpush1.bf16.msra.mxu0 0
  %1857 = vmatprep.subr.bf16.mxu0 0
  %1858 = vmatpush1.bf16.msra.mxu0 0
  %1859 = vmatprep.subr.bf16.mxu0 0
  %1860 = vmatpush1.bf16.msra.mxu0 0
  %1861 = vmatprep.subr.bf16.mxu0 0
  %1862 = vmatpush1.bf16.msra.mxu0 0
  %1863 = vmatprep.subr.bf16.mxu0 0
  %1864 = vmatpush1.bf16.msra.mxu0 0
  %1865 = vmatprep.subr.bf16.mxu0 0
  %1866 = vmatpush1.bf16.msra.mxu0 %v1849
  %1867 = vmatprep.subr.bf16.mxu0 0
  %1868 = vmatpush2.bf16.msra.mxu0 0
  %1869 = vmatprep.subr.bf16.mxu0 0
  %1870 = vmatpush2.bf16.msra.mxu0 0
  %1871 = vmatprep.subr.bf16.mxu0 0
  %1872 = vmatpush2.bf16.msra.mxu0 0
  %1873 = vmatprep.subr.bf16.mxu0 0
  %1874 = vmatpush2.bf16.msra.mxu0 0
  %1875 = vmatprep.subr.bf16.mxu0 0
  %1876 = vmatpush2.bf16.msra.mxu0 0
  %1877 = vmatprep.subr.bf16.mxu0 0
  %1878 = vmatpush2.bf16.msra.mxu0 0
  %1879 = vmatprep.subr.bf16.mxu0 0
  %1880 = vmatpush2.bf16.msra.mxu0 0
  %1881 = vmatprep.subr.bf16.mxu0 0
  %1882 = vmatpush2.bf16.msra.mxu0 0
  %1883 = vmatprep.mubr.bf16.mxu0 0
  %1884 = vmatmul.mubr.bf16.gmra.mxu0 %v1846
  %v1885 = vpop.f32.mrf.mxu0
  %v1886 = vadd.f32 0.0, %v1885
  %v1887 = vpop.f32.mrf.mxu0
  %v1888 = vpop.f32.mrf.mxu0
  %v1889 = vpop.f32.mrf.mxu0
  %1890 = vdwg.mxu0
  %v1892 = vsel %vm1613, %v1611, 0
  %v1895 = vsel %vm1617, %v1194, 0
  %1897 = vmatprep.subr.bf16.mxu0 0
  %1898 = vmatpush1.bf16.msra.mxu0 0
  %1899 = vmatprep.subr.bf16.mxu0 0
  %1900 = vmatpush1.bf16.msra.mxu0 0
  %1901 = vmatprep.subr.bf16.mxu0 0
  %1902 = vmatpush1.bf16.msra.mxu0 0
  %1903 = vmatprep.subr.bf16.mxu0 0
  %1904 = vmatpush1.bf16.msra.mxu0 0
  %1905 = vmatprep.subr.bf16.mxu0 0
  %1906 = vmatpush1.bf16.msra.mxu0 0
  %1907 = vmatprep.subr.bf16.mxu0 0
  %1908 = vmatpush1.bf16.msra.mxu0 0
  %1909 = vmatprep.subr.bf16.mxu0 0
  %1910 = vmatpush1.bf16.msra.mxu0 0
  %1911 = vmatprep.subr.bf16.mxu0 0
  %1912 = vmatpush1.bf16.msra.mxu0 %v1895
  %1913 = vmatprep.subr.bf16.mxu0 0
  %1914 = vmatpush2.bf16.msra.mxu0 0
  %1915 = vmatprep.subr.bf16.mxu0 0
  %1916 = vmatpush2.bf16.msra.mxu0 0
  %1917 = vmatprep.subr.bf16.mxu0 0
  %1918 = vmatpush2.bf16.msra.mxu0 0
  %1919 = vmatprep.subr.bf16.mxu0 0
  %1920 = vmatpush2.bf16.msra.mxu0 0
  %1921 = vmatprep.subr.bf16.mxu0 0
  %1922 = vmatpush2.bf16.msra.mxu0 0
  %1923 = vmatprep.subr.bf16.mxu0 0
  %1924 = vmatpush2.bf16.msra.mxu0 0
  %1925 = vmatprep.subr.bf16.mxu0 0
  %1926 = vmatpush2.bf16.msra.mxu0 0
  %1927 = vmatprep.subr.bf16.mxu0 0
  %1928 = vmatpush2.bf16.msra.mxu0 0
  %1929 = vmatprep.mubr.bf16.mxu0 0
  %1930 = vmatmul.mubr.bf16.gmra.mxu0 %v1892
  %v1931 = vpop.f32.mrf.mxu0
  %v1932 = vadd.f32 0.0, %v1931
  %v1933 = vpop.f32.mrf.mxu0
  %v1934 = vpop.f32.mrf.mxu0
  %v1935 = vpop.f32.mrf.mxu0
  %1936 = vdwg.mxu0
  %v1938 = vsel %vm1613, %v1612, 0
  %v1941 = vsel %vm1617, %v1195, 0
  %1943 = vmatprep.subr.bf16.mxu0 0
  %1944 = vmatpush1.bf16.msra.mxu0 0
  %1945 = vmatprep.subr.bf16.mxu0 0
  %1946 = vmatpush1.bf16.msra.mxu0 0
  %1947 = vmatprep.subr.bf16.mxu0 0
  %1948 = vmatpush1.bf16.msra.mxu0 0
  %1949 = vmatprep.subr.bf16.mxu0 0
  %1950 = vmatpush1.bf16.msra.mxu0 0
  %1951 = vmatprep.subr.bf16.mxu0 0
  %1952 = vmatpush1.bf16.msra.mxu0 0
  %1953 = vmatprep.subr.bf16.mxu0 0
  %1954 = vmatpush1.bf16.msra.mxu0 0
  %1955 = vmatprep.subr.bf16.mxu0 0
  %1956 = vmatpush1.bf16.msra.mxu0 0
  %1957 = vmatprep.subr.bf16.mxu0 0
  %1958 = vmatpush1.bf16.msra.mxu0 %v1941
  %1959 = vmatprep.subr.bf16.mxu0 0
  %1960 = vmatpush2.bf16.msra.mxu0 0
  %1961 = vmatprep.subr.bf16.mxu0 0
  %1962 = vmatpush2.bf16.msra.mxu0 0
  %1963 = vmatprep.subr.bf16.mxu0 0
  %1964 = vmatpush2.bf16.msra.mxu0 0
  %1965 = vmatprep.subr.bf16.mxu0 0
  %1966 = vmatpush2.bf16.msra.mxu0 0
  %1967 = vmatprep.subr.bf16.mxu0 0
  %1968 = vmatpush2.bf16.msra.mxu0 0
  %1969 = vmatprep.subr.bf16.mxu0 0
  %1970 = vmatpush2.bf16.msra.mxu0 0
  %1971 = vmatprep.subr.bf16.mxu0 0
  %1972 = vmatpush2.bf16.msra.mxu0 0
  %1973 = vmatprep.subr.bf16.mxu0 0
  %1974 = vmatpush2.bf16.msra.mxu0 0
  %1975 = vmatprep.mubr.bf16.mxu0 0
  %1976 = vmatmul.mubr.bf16.gmra.mxu0 %v1938
  %v1977 = vpop.f32.mrf.mxu0
  %v1978 = vadd.f32 0.0, %v1977
  %v1979 = vpop.f32.mrf.mxu0
  %v1980 = vpop.f32.mrf.mxu0
  %v1981 = vpop.f32.mrf.mxu0
  %1982 = vdwg.mxu0
  %v1983 = vcombine.low %v1656, %v1748
  %v1984 = vcombine.high %v1656, %v1748
  %v1986 = vunpack.c.l.s4 1983009808
  %v1987 = vunpack.c.0.s8 %v1986
  %v1988 = vlaneseq
  %v1989 = vshrl.u32 %v1988, 7
  %v1990 = vsub.s32 %v1987, %v1989
  %v1991 = vrot.slane %v1983, %v1990
  %v1993 = vunpack.c.l.s4 1983009808
  %v1994 = vunpack.c.0.s8 %v1993
  %v1995 = vlaneseq
  %v1996 = vshrl.u32 %v1995, 7
  %v1997 = vsub.s32 %v1994, %v1996
  %v1998 = vrot.slane %v1984, %v1997
  %v1999 = vcombine.low %v1702, %v1794
  %v2000 = vcombine.high %v1702, %v1794
  %v2002 = vunpack.c.l.s4 1983009808
  %v2003 = vunpack.c.0.s8 %v2002
  %v2004 = vlaneseq
  %v2005 = vshrl.u32 %v2004, 7
  %v2006 = vsub.s32 %v2003, %v2005
  %v2007 = vrot.slane %v1999, %v2006
  %v2009 = vunpack.c.l.s4 1983009808
  %v2010 = vunpack.c.0.s8 %v2009
  %v2011 = vlaneseq
  %v2012 = vshrl.u32 %v2011, 7
  %v2013 = vsub.s32 %v2010, %v2012
  %v2014 = vrot.slane %v2000, %v2013
  %v2015 = vcombine.low %v1840, %v1932
  %v2016 = vcombine.high %v1840, %v1932
  %v2018 = vunpack.c.l.s4 1983009808
  %v2019 = vunpack.c.0.s8 %v2018
  %v2020 = vlaneseq
  %v2021 = vshrl.u32 %v2020, 7
  %v2022 = vsub.s32 %v2019, %v2021
  %v2023 = vrot.slane %v2015, %v2022
  %v2025 = vunpack.c.l.s4 1983009808
  %v2026 = vunpack.c.0.s8 %v2025
  %v2027 = vlaneseq
  %v2028 = vshrl.u32 %v2027, 7
  %v2029 = vsub.s32 %v2026, %v2028
  %v2030 = vrot.slane %v2016, %v2029
  %v2031 = vcombine.low %v1886, %v1978
  %v2032 = vcombine.high %v1886, %v1978
  %v2034 = vunpack.c.l.s4 1983009808
  %v2035 = vunpack.c.0.s8 %v2034
  %v2036 = vlaneseq
  %v2037 = vshrl.u32 %v2036, 7
  %v2038 = vsub.s32 %v2035, %v2037
  %v2039 = vrot.slane %v2031, %v2038
  %v2041 = vunpack.c.l.s4 1983009808
  %v2042 = vunpack.c.0.s8 %v2041
  %v2043 = vlaneseq
  %v2044 = vshrl.u32 %v2043, 7
  %v2045 = vsub.s32 %v2042, %v2044
  %v2046 = vrot.slane %v2032, %v2045
  %v2047 = vcombine.low %v1991, %v2007
  %v2048 = vcombine.high %v1991, %v2007
  %v2050 = vunpack.c.l.s4 1934713408
  %v2051 = vunpack.c.0.s8 %v2050
  %v2052 = vlaneseq
  %v2053 = vshrl.u32 %v2052, 7
  %v2054 = vsub.s32 %v2051, %v2053
  %v2055 = vrot.slane %v2047, %v2054
  %v2057 = vunpack.c.l.s4 1934713408
  %v2058 = vunpack.c.0.s8 %v2057
  %v2059 = vlaneseq
  %v2060 = vshrl.u32 %v2059, 7
  %v2061 = vsub.s32 %v2058, %v2060
  %v2062 = vrot.slane %v2048, %v2061
  %v2063 = vcombine.low %v1998, %v2014
  %v2065 = vunpack.c.l.s4 1934713408
  %v2066 = vunpack.c.0.s8 %v2065
  %v2067 = vlaneseq
  %v2068 = vshrl.u32 %v2067, 7
  %v2069 = vsub.s32 %v2066, %v2068
  %v2070 = vrot.slane %v2063, %v2069
  %v2071 = vcombine.low %v2023, %v2039
  %v2072 = vcombine.high %v2023, %v2039
  %v2074 = vunpack.c.l.s4 1934713408
  %v2075 = vunpack.c.0.s8 %v2074
  %v2076 = vlaneseq
  %v2077 = vshrl.u32 %v2076, 7
  %v2078 = vsub.s32 %v2075, %v2077
  %v2079 = vrot.slane %v2071, %v2078
  %v2081 = vunpack.c.l.s4 1934713408
  %v2082 = vunpack.c.0.s8 %v2081
  %v2083 = vlaneseq
  %v2084 = vshrl.u32 %v2083, 7
  %v2085 = vsub.s32 %v2082, %v2084
  %v2086 = vrot.slane %v2072, %v2085
  %v2087 = vcombine.low %v2030, %v2046
  %v2089 = vunpack.c.l.s4 1934713408
  %v2090 = vunpack.c.0.s8 %v2089
  %v2091 = vlaneseq
  %v2092 = vshrl.u32 %v2091, 7
  %v2093 = vsub.s32 %v2090, %v2092
  %v2094 = vrot.slane %v2087, %v2093
  %v2095 = vcombine.low %v2055, %v2079
  %v2096 = vcombine.high %v2055, %v2079
  %v2097 = vcombine.low %v2062, %v2086
  %v2098 = vcombine.high %v2062, %v2086
  %v2099 = vcombine.low %v2070, %v2094
  %v2100 = vcombine.high %v2070, %v2094
  %v2101 = vpack.c.bf16 %v2096, %v2095
  %v2102 = vpack.c.bf16 %v2098, %v2097
  %v2103 = vpack.c.bf16 %v2100, %v2099
  %v2104 = vpack.c.bf16 %v1041, %v1040
  %v2105 = vpack.c.bf16 %v1043, %v1042
  %v2106 = vpack.c.bf16 %v1045, %v1044
  %v2107 = vld [vmem:[%s7] sm:$0xf]
  %v2108 = vld [vmem:[%s7 + $0x4] sm:$0xf]
  %v2109 = vld [vmem:[%s7 + $0x8] sm:$0xf]
  %v2110 = vld [vmem:[%s7 + $0xc] sm:$0xf]
  %v2111 = vld [vmem:[%s7 + $0x10] sm:$0xf]
  %v2112 = vld [vmem:[%s7 + $0x14] sm:$0xf]
  %v2113 = vld [vmem:[%s7 + $0x18] sm:$0xf]
  %v2114 = vld [vmem:[%s7 + $0x1c] sm:$0xf]
  %v2115 = vld [vmem:[%s7 + $0x20] sm:$0xf]
  %v2116 = vld [vmem:[%s7 + $0x24] sm:$0xf]
  %v2117 = vld [vmem:[%s7 + $0x28] sm:$0xf]
  %v2118 = vld [vmem:[%s7 + $0x2c] sm:$0xf]
  %v2119 = vld [vmem:[%s7 + $0x30] sm:$0xf]
  %v2120 = vld [vmem:[%s7 + $0x34] sm:$0xf]
  %v2121 = vld [vmem:[%s7 + $0x38] sm:$0xf]
  %v2122 = vld [vmem:[%s7 + $0x3c] sm:$0xf]
  %v2123 = vld [vmem:[%s8] sm:$0xf]
  %v2124 = vld [vmem:[%s8 + $0x4] sm:$0xf]
  %v2125 = vld [vmem:[%s8 + $0x8] sm:$0xf]
  %v2126 = vld [vmem:[%s8 + $0xc] sm:$0xf]
  %v2127 = vld [vmem:[%s8 + $0x10] sm:$0xf]
  %v2128 = vld [vmem:[%s8 + $0x14] sm:$0xf]
  %v2129 = vld [vmem:[%s8 + $0x18] sm:$0xf]
  %v2130 = vld [vmem:[%s8 + $0x1c] sm:$0xf]
  %v2131 = vld [vmem:[%s8 + $0x20] sm:$0xf]
  %v2132 = vld [vmem:[%s8 + $0x24] sm:$0xf]
  %v2133 = vld [vmem:[%s8 + $0x28] sm:$0xf]
  %v2134 = vld [vmem:[%s8 + $0x2c] sm:$0xf]
  %v2135 = vld [vmem:[%s8 + $0x30] sm:$0xf]
  %v2136 = vld [vmem:[%s8 + $0x34] sm:$0xf]
  %v2137 = vld [vmem:[%s8 + $0x38] sm:$0xf]
  %v2138 = vld [vmem:[%s8 + $0x3c] sm:$0xf]
  %v2155 = vunpack.c.l.b16 %v2123
  %v2156 = vunpack.c.l.b16 %v2124
  %v2157 = vunpack.c.l.b16 %v2125
  %v2158 = vunpack.c.l.b16 %v2126
  %v2159 = vunpack.c.l.b16 %v2127
  %v2160 = vunpack.c.l.b16 %v2128
  %v2161 = vunpack.c.l.b16 %v2129
  %v2162 = vunpack.c.l.b16 %v2130
  %v2163 = vunpack.c.l.b16 %v2131
  %v2164 = vunpack.c.l.b16 %v2132
  %v2165 = vunpack.c.l.b16 %v2133
  %v2166 = vunpack.c.l.b16 %v2134
  %v2167 = vunpack.c.l.b16 %v2135
  %v2168 = vunpack.c.l.b16 %v2136
  %v2169 = vunpack.c.l.b16 %v2137
  %v2170 = vunpack.c.l.b16 %v2138
  %v2171 = vpack.c.b16 %v2156, %v2155
  %v2172 = vpack.c.b16 %v2158, %v2157
  %v2173 = vpack.c.b16 %v2160, %v2159
  %v2174 = vpack.c.b16 %v2162, %v2161
  %v2175 = vpack.c.b16 %v2164, %v2163
  %v2176 = vpack.c.b16 %v2166, %v2165
  %v2177 = vpack.c.b16 %v2168, %v2167
  %v2178 = vpack.c.b16 %v2170, %v2169
  %2187 = vmatprep.subr.bf16.mxu0 0
  %2188 = vmatpush1.bf16.msra.mxu0 %v2178
  %2189 = vmatprep.subr.bf16.mxu0 0
  %2190 = vmatpush1.bf16.msra.mxu0 %v2177
  %2191 = vmatprep.subr.bf16.mxu0 0
  %2192 = vmatpush1.bf16.msra.mxu0 %v2176
  %2193 = vmatprep.subr.bf16.mxu0 0
  %2194 = vmatpush1.bf16.msra.mxu0 %v2175
  %2195 = vmatprep.subr.bf16.mxu0 0
  %2196 = vmatpush1.bf16.msra.mxu0 %v2174
  %2197 = vmatprep.subr.bf16.mxu0 0
  %2198 = vmatpush1.bf16.msra.mxu0 %v2173
  %2199 = vmatprep.subr.bf16.mxu0 0
  %2200 = vmatpush1.bf16.msra.mxu0 %v2172
  %2201 = vmatprep.subr.bf16.mxu0 0
  %2202 = vmatpush1.bf16.msra.mxu0 %v2171
  %2203 = vmatprep.subr.bf16.mxu0 0
  %2204 = vmatpush2.bf16.msra.mxu0 0
  %2205 = vmatprep.subr.bf16.mxu0 0
  %2206 = vmatpush2.bf16.msra.mxu0 0
  %2207 = vmatprep.subr.bf16.mxu0 0
  %2208 = vmatpush2.bf16.msra.mxu0 0
  %2209 = vmatprep.subr.bf16.mxu0 0
  %2210 = vmatpush2.bf16.msra.mxu0 0
  %2211 = vmatprep.subr.bf16.mxu0 0
  %2212 = vmatpush2.bf16.msra.mxu0 0
  %2213 = vmatprep.subr.bf16.mxu0 0
  %2214 = vmatpush2.bf16.msra.mxu0 0
  %2215 = vmatprep.subr.bf16.mxu0 0
  %2216 = vmatpush2.bf16.msra.mxu0 0
  %2217 = vmatprep.subr.bf16.mxu0 0
  %2218 = vmatpush2.bf16.msra.mxu0 0
  %2219 = vmatprep.mubr.bf16.mxu0 0
  %2220 = vmatmul.mubr.bf16.gmra.mxu0 %v2104
  %v2221 = vpop.f32.mrf.mxu0
  %v2222 = vadd.f32 0.0, %v2221
  %v2223 = vpop.f32.mrf.mxu0
  %v2224 = vpop.f32.mrf.mxu0
  %v2225 = vadd.f32 0.0, %v2224
  %v2226 = vpop.f32.mrf.mxu0
  %2227 = vmatprep.mubr.bf16.mxu0 0
  %2228 = vmatmul.mubr.bf16.gmra.mxu0 %v2105
  %v2229 = vpop.f32.mrf.mxu0
  %v2230 = vadd.f32 0.0, %v2229
  %v2231 = vpop.f32.mrf.mxu0
  %v2232 = vpop.f32.mrf.mxu0
  %v2233 = vadd.f32 0.0, %v2232
  %v2234 = vpop.f32.mrf.mxu0
  %2235 = vmatprep.mubr.bf16.mxu0 0
  %2236 = vmatmul.mubr.bf16.gmra.mxu0 %v2106
  %v2237 = vpop.f32.mrf.mxu0
  %v2238 = vadd.f32 0.0, %v2237
  %v2239 = vpop.f32.mrf.mxu0
  %v2240 = vpop.f32.mrf.mxu0
  %v2241 = vadd.f32 0.0, %v2240
  %v2242 = vpop.f32.mrf.mxu0
  %2243 = vdwg.mxu0
  %v2260 = vunpack.c.l.b16 %v2107
  %v2261 = vunpack.c.l.b16 %v2108
  %v2262 = vunpack.c.l.b16 %v2109
  %v2263 = vunpack.c.l.b16 %v2110
  %v2264 = vunpack.c.l.b16 %v2111
  %v2265 = vunpack.c.l.b16 %v2112
  %v2266 = vunpack.c.l.b16 %v2113
  %v2267 = vunpack.c.l.b16 %v2114
  %v2268 = vunpack.c.l.b16 %v2115
  %v2269 = vunpack.c.l.b16 %v2116
  %v2270 = vunpack.c.l.b16 %v2117
  %v2271 = vunpack.c.l.b16 %v2118
  %v2272 = vunpack.c.l.b16 %v2119
  %v2273 = vunpack.c.l.b16 %v2120
  %v2274 = vunpack.c.l.b16 %v2121
  %v2275 = vunpack.c.l.b16 %v2122
  %v2276 = vpack.c.b16 %v2261, %v2260
  %v2277 = vpack.c.b16 %v2263, %v2262
  %v2278 = vpack.c.b16 %v2265, %v2264
  %v2279 = vpack.c.b16 %v2267, %v2266
  %v2280 = vpack.c.b16 %v2269, %v2268
  %v2281 = vpack.c.b16 %v2271, %v2270
  %v2282 = vpack.c.b16 %v2273, %v2272
  %v2283 = vpack.c.b16 %v2275, %v2274
  %2292 = vmatprep.subr.bf16.mxu0 0
  %2293 = vmatpush1.bf16.msra.mxu0 %v2283
  %2294 = vmatprep.subr.bf16.mxu0 0
  %2295 = vmatpush1.bf16.msra.mxu0 %v2282
  %2296 = vmatprep.subr.bf16.mxu0 0
  %2297 = vmatpush1.bf16.msra.mxu0 %v2281
  %2298 = vmatprep.subr.bf16.mxu0 0
  %2299 = vmatpush1.bf16.msra.mxu0 %v2280
  %2300 = vmatprep.subr.bf16.mxu0 0
  %2301 = vmatpush1.bf16.msra.mxu0 %v2279
  %2302 = vmatprep.subr.bf16.mxu0 0
  %2303 = vmatpush1.bf16.msra.mxu0 %v2278
  %2304 = vmatprep.subr.bf16.mxu0 0
  %2305 = vmatpush1.bf16.msra.mxu0 %v2277
  %2306 = vmatprep.subr.bf16.mxu0 0
  %2307 = vmatpush1.bf16.msra.mxu0 %v2276
  %2308 = vmatprep.subr.bf16.mxu0 0
  %2309 = vmatpush2.bf16.msra.mxu0 0
  %2310 = vmatprep.subr.bf16.mxu0 0
  %2311 = vmatpush2.bf16.msra.mxu0 0
  %2312 = vmatprep.subr.bf16.mxu0 0
  %2313 = vmatpush2.bf16.msra.mxu0 0
  %2314 = vmatprep.subr.bf16.mxu0 0
  %2315 = vmatpush2.bf16.msra.mxu0 0
  %2316 = vmatprep.subr.bf16.mxu0 0
  %2317 = vmatpush2.bf16.msra.mxu0 0
  %2318 = vmatprep.subr.bf16.mxu0 0
  %2319 = vmatpush2.bf16.msra.mxu0 0
  %2320 = vmatprep.subr.bf16.mxu0 0
  %2321 = vmatpush2.bf16.msra.mxu0 0
  %2322 = vmatprep.subr.bf16.mxu0 0
  %2323 = vmatpush2.bf16.msra.mxu0 0
  %2324 = vmatprep.mubr.bf16.mxu0 0
  %2325 = vmatmul.mubr.bf16.gmra.mxu0 %v2101
  %v2326 = vpop.f32.mrf.mxu0
  %v2327 = vadd.f32 %v2222, %v2326
  %v2328 = vpop.f32.mrf.mxu0
  %v2329 = vpop.f32.mrf.mxu0
  %v2330 = vadd.f32 %v2225, %v2329
  %v2331 = vpop.f32.mrf.mxu0
  %2332 = vmatprep.mubr.bf16.mxu0 0
  %2333 = vmatmul.mubr.bf16.gmra.mxu0 %v2102
  %v2334 = vpop.f32.mrf.mxu0
  %v2335 = vadd.f32 %v2230, %v2334
  %v2336 = vpop.f32.mrf.mxu0
  %v2337 = vpop.f32.mrf.mxu0
  %v2338 = vadd.f32 %v2233, %v2337
  %v2339 = vpop.f32.mrf.mxu0
  %2340 = vmatprep.mubr.bf16.mxu0 0
  %2341 = vmatmul.mubr.bf16.gmra.mxu0 %v2103
  %v2342 = vpop.f32.mrf.mxu0
  %v2343 = vadd.f32 %v2238, %v2342
  %v2344 = vpop.f32.mrf.mxu0
  %v2345 = vpop.f32.mrf.mxu0
  %v2346 = vadd.f32 %v2241, %v2345
  %v2347 = vpop.f32.mrf.mxu0
  %2348 = vdwg.mxu0
  %v2349 = vld [vmem:[%s9] sm:$0x1]
  %v2351 = vlaneseq
  %v2352 = vshrl.u32 %v2351, 7
  %v2353 = vsub.s32 0, %v2352
  %v2354 = vrot.slane %v2349, %v2353
  %v2356 = vadd.f32 %v2327, %v2354
  %v2357 = vadd.f32 %v2330, %v2354
  %v2358 = vadd.f32 %v2335, %v2354
  %v2359 = vadd.f32 %v2338, %v2354
  %v2360 = vadd.f32 %v2343, %v2354
  %v2361 = vadd.f32 %v2346, %v2354
  %v2362 = vtanh.pop %v2356
  %v2363 = vtanh.pop %v2357
  %v2364 = vtanh.pop %v2358
  %v2365 = vtanh.pop %v2359
  %v2366 = vtanh.pop %v2360
  %v2367 = vtanh.pop %v2361
  %v2368 = vpack.c.bf16 %v2363, %v2362
  %v2369 = vpack.c.bf16 %v2365, %v2364
  %v2370 = vpack.c.bf16 %v2367, %v2366
  %v2371 = vld [vmem:[%s10] sm:$0xf]
  %v2372 = vld [vmem:[%s10 + $0x4] sm:$0xf]
  %v2373 = vld [vmem:[%s10 + $0x8] sm:$0xf]
  %v2374 = vld [vmem:[%s10 + $0xc] sm:$0xf]
  %v2375 = vld [vmem:[%s10 + $0x10] sm:$0xf]
  %v2376 = vld [vmem:[%s10 + $0x14] sm:$0xf]
  %v2377 = vld [vmem:[%s10 + $0x18] sm:$0xf]
  %v2378 = vld [vmem:[%s10 + $0x1c] sm:$0xf]
  %v2379 = vld [vmem:[%s10 + $0x20] sm:$0xf]
  %v2380 = vld [vmem:[%s10 + $0x24] sm:$0xf]
  %v2381 = vld [vmem:[%s10 + $0x28] sm:$0xf]
  %v2382 = vld [vmem:[%s10 + $0x2c] sm:$0xf]
  %v2383 = vld [vmem:[%s10 + $0x30] sm:$0xf]
  %v2384 = vld [vmem:[%s10 + $0x34] sm:$0xf]
  %v2385 = vld [vmem:[%s10 + $0x38] sm:$0xf]
  %v2386 = vld [vmem:[%s10 + $0x3c] sm:$0xf]
  %v2387 = vld [vmem:[%s11] sm:$0x1]
  %v2389 = vlaneseq
  %v2390 = vshrl.u32 %v2389, 7
  %v2391 = vsub.s32 0, %v2390
  %v2392 = vrot.slane %v2387, %v2391
  %v2410 = vunpack.c.l.b16 %v2371
  %v2411 = vunpack.c.l.b16 %v2372
  %v2412 = vunpack.c.l.b16 %v2373
  %v2413 = vunpack.c.l.b16 %v2374
  %v2414 = vunpack.c.l.b16 %v2375
  %v2415 = vunpack.c.l.b16 %v2376
  %v2416 = vunpack.c.l.b16 %v2377
  %v2417 = vunpack.c.l.b16 %v2378
  %v2418 = vunpack.c.l.b16 %v2379
  %v2419 = vunpack.c.l.b16 %v2380
  %v2420 = vunpack.c.l.b16 %v2381
  %v2421 = vunpack.c.l.b16 %v2382
  %v2422 = vunpack.c.l.b16 %v2383
  %v2423 = vunpack.c.l.b16 %v2384
  %v2424 = vunpack.c.l.b16 %v2385
  %v2425 = vunpack.c.l.b16 %v2386
  %v2426 = vpack.c.b16 %v2411, %v2410
  %v2427 = vpack.c.b16 %v2413, %v2412
  %v2428 = vpack.c.b16 %v2415, %v2414
  %v2429 = vpack.c.b16 %v2417, %v2416
  %v2430 = vpack.c.b16 %v2419, %v2418
  %v2431 = vpack.c.b16 %v2421, %v2420
  %v2432 = vpack.c.b16 %v2423, %v2422
  %v2433 = vpack.c.b16 %v2425, %v2424
  %2442 = vmatprep.subr.bf16.mxu0 0
  %2443 = vmatpush1.bf16.msra.mxu0 %v2433
  %2444 = vmatprep.subr.bf16.mxu0 0
  %2445 = vmatpush1.bf16.msra.mxu0 %v2432
  %2446 = vmatprep.subr.bf16.mxu0 0
  %2447 = vmatpush1.bf16.msra.mxu0 %v2431
  %2448 = vmatprep.subr.bf16.mxu0 0
  %2449 = vmatpush1.bf16.msra.mxu0 %v2430
  %2450 = vmatprep.subr.bf16.mxu0 0
  %2451 = vmatpush1.bf16.msra.mxu0 %v2429
  %2452 = vmatprep.subr.bf16.mxu0 0
  %2453 = vmatpush1.bf16.msra.mxu0 %v2428
  %2454 = vmatprep.subr.bf16.mxu0 0
  %2455 = vmatpush1.bf16.msra.mxu0 %v2427
  %2456 = vmatprep.subr.bf16.mxu0 0
  %2457 = vmatpush1.bf16.msra.mxu0 %v2426
  %2458 = vmatprep.subr.bf16.mxu0 0
  %2459 = vmatpush2.bf16.msra.mxu0 0
  %2460 = vmatprep.subr.bf16.mxu0 0
  %2461 = vmatpush2.bf16.msra.mxu0 0
  %2462 = vmatprep.subr.bf16.mxu0 0
  %2463 = vmatpush2.bf16.msra.mxu0 0
  %2464 = vmatprep.subr.bf16.mxu0 0
  %2465 = vmatpush2.bf16.msra.mxu0 0
  %2466 = vmatprep.subr.bf16.mxu0 0
  %2467 = vmatpush2.bf16.msra.mxu0 0
  %2468 = vmatprep.subr.bf16.mxu0 0
  %2469 = vmatpush2.bf16.msra.mxu0 0
  %2470 = vmatprep.subr.bf16.mxu0 0
  %2471 = vmatpush2.bf16.msra.mxu0 0
  %2472 = vmatprep.subr.bf16.mxu0 0
  %2473 = vmatpush2.bf16.msra.mxu0 0
  %2474 = vmatprep.mubr.bf16.mxu0 0
  %2475 = vmatmul.mubr.bf16.gmra.mxu0 %v2368
  %v2476 = vpop.f32.mrf.mxu0
  %v2477 = vadd.f32 %v2392, %v2476
  %v2478 = vpop.f32.mrf.mxu0
  %v2479 = vpop.f32.mrf.mxu0
  %v2480 = vadd.f32 %v2392, %v2479
  %v2481 = vpop.f32.mrf.mxu0
  %2482 = vmatprep.mubr.bf16.mxu0 0
  %2483 = vmatmul.mubr.bf16.gmra.mxu0 %v2369
  %v2484 = vpop.f32.mrf.mxu0
  %v2485 = vadd.f32 %v2392, %v2484
  %v2486 = vpop.f32.mrf.mxu0
  %v2487 = vpop.f32.mrf.mxu0
  %v2488 = vadd.f32 %v2392, %v2487
  %v2489 = vpop.f32.mrf.mxu0
  %2490 = vmatprep.mubr.bf16.mxu0 0
  %2491 = vmatmul.mubr.bf16.gmra.mxu0 %v2370
  %v2492 = vpop.f32.mrf.mxu0
  %v2493 = vadd.f32 %v2392, %v2492
  %v2494 = vpop.f32.mrf.mxu0
  %v2495 = vpop.f32.mrf.mxu0
  %v2496 = vadd.f32 %v2392, %v2495
  %v2497 = vpop.f32.mrf.mxu0
  %2498 = vdwg.mxu0
  %2499 = vst [vmem:[%s12] sm:$0xff] %v2477
  %2500 = vst [vmem:[%s12 + $0x8] sm:$0xff] %v2480
  %2501 = vst [vmem:[%s12 + $0x10] sm:$0xff] %v2485
  %2502 = vst [vmem:[%s12 + $0x18] sm:$0xff] %v2488
  %2503 = vst [vmem:[%s12 + $0x20] sm:$0xff] %v2493
  %2504 = vst [vmem:[%s12 + $0x28] sm:$0xff] %v2496
  // Predicated region
  $region50: #{decoder_forward.1} parent=0 // pred_check
    _
  $region51: #{decoder_forward.1} parent=0 // pred_check_branch
    %2506 = sbr.rel (0) target = $region53
  $region52: #{decoder_forward.1} parent=0 // pred_region
    _
  $region53: #{decoder_forward.1} parent=0 // pred_fallthru
    _
  // Predicated region
  $region54: #{decoder_forward.1} parent=0 // pred_check
    _
  $region55: #{decoder_forward.1} parent=0 // pred_check_branch
    %2508 = sbr.rel (0) target = $region57
  $region56: #{decoder_forward.1} parent=0 // pred_region
    _
  $region57: #{decoder_forward.1} parent=0 // pred_fallthru
    _
  // Predicated region
  $region58: #{decoder_forward.1} parent=0 // pred_check
    _
  $region59: #{decoder_forward.1} parent=0 // pred_check_branch
    %2510 = sbr.rel (0) target = $region61
  $region60: #{decoder_forward.1} parent=0 // pred_region
    _
  $region61: #{decoder_forward.1} parent=0 // pred_fallthru
    _
  // Predicated region
  $region62: #{decoder_forward.1} parent=0 // pred_check
    _
  $region63: #{decoder_forward.1} parent=0 // pred_check_branch
    %2512 = sbr.rel (0) target = $region65
  $region64: #{decoder_forward.1} parent=0 // pred_region
    _
  $region65: #{decoder_forward.1} parent=0 // pred_fallthru
    _

</llo_original>
